<compile_context>
chip_gen: v7x
topology: tpu7x:2x2x1
jax: 0.10.0
libtpu: 0.0.40
codegen_flags: <defaults>
</compile_context>

<pallas_src>
import functools

import jax
import jax.numpy as jnp
from jax import lax
from jax.experimental import pallas as pl
from jax.experimental.pallas import tpu as pltpu


def _attn_kernel(x_ref, wq_ref, wk_ref, wv_ref, wu_ref, bias_ref, o_ref,
                 *, num_heads, k_dim):
    """One batch element per grid step; all heads fused.

    x_ref    : (1, T, K)   input sequence for this batch element
    wq/wk/wv : (K, H*K)    packed projections (y = x @ W form; q/k scale folded)
    wu_ref   : (H*K, K)    packed unify projection
    bias_ref : (1, K)      unify bias
    o_ref    : (1, T, K)   output block
    """
    x = x_ref[0]                                                        # (T, K)

    # One 256-lane-wide matmul per projection (all heads at once).
    q_all = jnp.dot(x, wq_ref[...], preferred_element_type=jnp.float32)  # (T, H*K)
    k_all = jnp.dot(x, wk_ref[...], preferred_element_type=jnp.float32)  # (T, H*K)
    v_all = jnp.dot(x, wv_ref[...], preferred_element_type=jnp.float32)  # (T, H*K)

    head_outs = []
    for h in range(num_heads):                                          # static unroll (H=8)
        lo = h * k_dim
        qh = q_all[:, lo:lo + k_dim]                                     # (T, K)
        kh = k_all[:, lo:lo + k_dim]
        vh = v_all[:, lo:lo + k_dim]

        # scores = qh @ kh.T via contraction on the shared feature axis
        # (no materialized transpose; lowered with a transposed-RHS MXU op).
        s = lax.dot_general(qh, kh,
                            dimension_numbers=(((1,), (1,)), ((), ())),
                            preferred_element_type=jnp.float32)          # (T, T)

        # softmax over the key axis (f32 throughout; EUP approx reciprocal).
        m = jnp.max(s, axis=-1, keepdims=True)
        p = jnp.exp(s - m)
        w = p * pl.reciprocal(jnp.sum(p, axis=-1, keepdims=True), approx=True)

        head_outs.append(jnp.dot(w, vh, preferred_element_type=jnp.float32))  # (T, K)

    # Single 256-wide unify contraction instead of 8 accumulating matmuls.
    concat = jnp.concatenate(head_outs, axis=-1)                         # (T, H*K)
    out = jnp.dot(concat, wu_ref[...], preferred_element_type=jnp.float32)  # (T, K)
    o_ref[0] = (out + bias_ref[...]).astype(o_ref.dtype)


def prepare_params(wq, wk, wv, wu, bu, *, num_heads):
    """One-time weight repacking (do this at parameter-load time, not per call).

    PyTorch Linear stores W as (out_features, in_features); y = x @ W.T.
    The H*K output axis is already head-major (index = h*K + d), so a plain
    transpose gives contiguous per-head column/row blocks.
    The 1/k^0.25 scaling of q and k is folded into Wq / Wk here.
    """
    k = wq.shape[1]
    scale = k ** (-0.25)
    wq_all = jnp.transpose(wq) * scale          # (K, H*K)
    wk_all = jnp.transpose(wk) * scale          # (K, H*K)
    wv_all = jnp.transpose(wv)                  # (K, H*K)
    wu_all = jnp.transpose(wu)                  # (H*K, K)
    bias = bu.reshape(1, k)                     # (1, K)
    return wq_all, wk_all, wv_all, wu_all, bias


@functools.partial(jax.jit, static_argnames=("num_heads",))
def attention_layer(x, wq_all, wk_all, wv_all, wu_all, bias, *, num_heads):
    """Pallas implementation of AttentionLayer.forward (pre-packed weights)."""
    b, t, k = x.shape
    hk = num_heads * k
    kernel = functools.partial(_attn_kernel, num_heads=num_heads, k_dim=k)

    return pl.pallas_call(
        kernel,
        out_shape=jax.ShapeDtypeStruct((b, t, k), x.dtype),
        grid_spec=pltpu.PrefetchScalarGridSpec(
            num_scalar_prefetch=0,
            grid=(b,),
            in_specs=[
                pl.BlockSpec((1, t, k), lambda bi: (bi, 0, 0)),   # x (per batch)
                # Weights: full-array blocks with constant index maps ->
                # DMA'd once, VMEM-resident across the whole grid.
                pl.BlockSpec((k, hk), lambda bi: (0, 0)),          # Wq_all
                pl.BlockSpec((k, hk), lambda bi: (0, 0)),          # Wk_all
                pl.BlockSpec((k, hk), lambda bi: (0, 0)),          # Wv_all
                pl.BlockSpec((hk, k), lambda bi: (0, 0)),          # Wu_all
                pl.BlockSpec((1, k), lambda bi: (0, 0)),           # bias
            ],
            out_specs=pl.BlockSpec((1, t, k), lambda bi: (bi, 0, 0)),
        ),
        compiler_params=pltpu.CompilerParams(
            # batch axis parallel -> both v7x TensorCores take one element.
            dimension_semantics=("parallel",)),
    )(x, wq_all, wk_all, wv_all, wu_all, bias)


def attention_layer_ref(x, wq, wk, wv, wu, bu, *, num_heads):
    """Pure-JAX reference mirroring the PyTorch forward exactly."""
    b, t, k = x.shape
    h = num_heads
    keys = (x @ wk.T).reshape(b, t, h, k)
    queries = (x @ wq.T).reshape(b, t, h, k)
    values = (x @ wv.T).reshape(b, t, h, k)
    keys = jnp.transpose(keys, (0, 2, 1, 3)).reshape(b * h, t, k)
    queries = jnp.transpose(queries, (0, 2, 1, 3)).reshape(b * h, t, k)
    values = jnp.transpose(values, (0, 2, 1, 3)).reshape(b * h, t, k)
    queries = queries / k ** 0.25
    keys = keys / k ** 0.25
    raw = jnp.einsum('btk,bsk->bts', queries, keys)
    w = jax.nn.softmax(raw, axis=2)
    out = jnp.einsum('bts,bsk->btk', w, values).reshape(b, h, t, k)
    out = jnp.transpose(out, (0, 2, 1, 3)).reshape(b, t, h * k)
    return out @ wu.T + bu


if __name__ == "__main__":
    B, T, K, H = 2, 8, 32, 8   # num_heads = 8 as in the module

    key = jax.random.PRNGKey(0)
    kx, kq, kk_, kv, ku, kb = jax.random.split(key, 6)

    x = jax.random.normal(kx, (B, T, K), dtype=jnp.float32)
    # deterministic synthetic weights (shapes match nn.Linear in __init__)
    bound = 1.0 / (K ** 0.5)
    wq = jax.random.uniform(kq, (H * K, K), minval=-bound, maxval=bound,
                            dtype=jnp.float32)
    wk = jax.random.uniform(kk_, (H * K, K), minval=-bound, maxval=bound,
                            dtype=jnp.float32)
    wv = jax.random.uniform(kv, (H * K, K), minval=-bound, maxval=bound,
                            dtype=jnp.float32)
    bound_u = 1.0 / ((H * K) ** 0.5)
    wu = jax.random.uniform(ku, (K, H * K), minval=-bound_u, maxval=bound_u,
                            dtype=jnp.float32)
    bu = jax.random.uniform(kb, (K,), minval=-bound_u, maxval=bound_u,
                            dtype=jnp.float32)

    # One-time weight packing (kept out of the per-call path).
    params = prepare_params(wq, wk, wv, wu, bu, num_heads=H)

    out = attention_layer(x, *params, num_heads=H)
    out = jax.block_until_ready(out)

    ref = attention_layer_ref(x, wq, wk, wv, wu, bu, num_heads=H)
    assert out.shape == (B, T, K)
    # Tolerance accommodates the hardware-approximate reciprocal used for the
    # softmax normalization; any structural error would be orders larger.
    assert jnp.allclose(out, ref, atol=5e-3, rtol=5e-3), "mismatch vs reference"

    print("KERNEL_OK")
</pallas_src>

<mosaic_0001>
module attributes {stable_mosaic.version = 11 : i64} {
  func.func @_attn_kernel(%arg0: i32, %arg1: memref<1x8x32xf32, #tpu.memory_space<vmem>>, %arg2: memref<32x256xf32, #tpu.memory_space<vmem>>, %arg3: memref<32x256xf32, #tpu.memory_space<vmem>>, %arg4: memref<32x256xf32, #tpu.memory_space<vmem>>, %arg5: memref<256x32xf32, #tpu.memory_space<vmem>>, %arg6: memref<1x32xf32, #tpu.memory_space<vmem>>, %arg7: memref<1x8x32xf32, #tpu.memory_space<vmem>>) attributes {dimension_semantics = [#tpu.dimension_semantics<parallel>], iteration_bounds = array<i64: 2>, scalar_prefetch = 0 : i64, scratch_operands = 0 : i64, tpu.core_type = #tpu.core_type<tc>, window_params = [{transform_indices = @transform_0, window_bounds = array<i64: 1, 8, 32>}, {pipeline_mode = #tpu.pipeline_mode<synchronous>, transform_indices = @transform_1, window_bounds = array<i64: 32, 256>}, {pipeline_mode = #tpu.pipeline_mode<synchronous>, transform_indices = @transform_2, window_bounds = array<i64: 32, 256>}, {pipeline_mode = #tpu.pipeline_mode<synchronous>, transform_indices = @transform_3, window_bounds = array<i64: 32, 256>}, {pipeline_mode = #tpu.pipeline_mode<synchronous>, transform_indices = @transform_4, window_bounds = array<i64: 256, 32>}, {pipeline_mode = #tpu.pipeline_mode<synchronous>, transform_indices = @transform_5, window_bounds = array<i64: 1, 32>}, {transform_indices = @transform_6, window_bounds = array<i64: 1, 8, 32>}]} {
    %c0 = arith.constant 0 : index
    %c0_0 = arith.constant 0 : index
    %c0_1 = arith.constant 0 : index
    %0 = vector.load %arg1[%c0, %c0_0, %c0_1] : memref<1x8x32xf32, #tpu.memory_space<vmem>>, vector<1x8x32xf32>
    %1 = vector.shape_cast %0 : vector<1x8x32xf32> to vector<8x32xf32>
    %c0_2 = arith.constant 0 : index
    %c0_3 = arith.constant 0 : index
    %2 = vector.load %arg2[%c0_2, %c0_3] : memref<32x256xf32, #tpu.memory_space<vmem>>, vector<32x256xf32>
    %cst = arith.constant dense<0.000000e+00> : vector<8x256xf32>
    %3 = tpu.matmul %1, %2, %cst {dimension_numbers = #tpu.dot_dimension_numbers<[1], [0], [0], [1], [0, 0, 1, 1], [], []>} : vector<8x32xf32>, vector<32x256xf32>, vector<8x256xf32> -> vector<8x256xf32>
    %c0_4 = arith.constant 0 : index
    %c0_5 = arith.constant 0 : index
    %4 = vector.load %arg3[%c0_4, %c0_5] : memref<32x256xf32, #tpu.memory_space<vmem>>, vector<32x256xf32>
    %cst_6 = arith.constant dense<0.000000e+00> : vector<8x256xf32>
    %5 = tpu.matmul %1, %4, %cst_6 {dimension_numbers = #tpu.dot_dimension_numbers<[1], [0], [0], [1], [0, 0, 1, 1], [], []>} : vector<8x32xf32>, vector<32x256xf32>, vector<8x256xf32> -> vector<8x256xf32>
    %c0_7 = arith.constant 0 : index
    %c0_8 = arith.constant 0 : index
    %6 = vector.load %arg4[%c0_7, %c0_8] : memref<32x256xf32, #tpu.memory_space<vmem>>, vector<32x256xf32>
    %cst_9 = arith.constant dense<0.000000e+00> : vector<8x256xf32>
    %7 = tpu.matmul %1, %6, %cst_9 {dimension_numbers = #tpu.dot_dimension_numbers<[1], [0], [0], [1], [0, 0, 1, 1], [], []>} : vector<8x32xf32>, vector<32x256xf32>, vector<8x256xf32> -> vector<8x256xf32>
    %8 = vector.extract_strided_slice %3 {offsets = [0, 0], sizes = [8, 32], strides = [1, 1]} : vector<8x256xf32> to vector<8x32xf32>
    %9 = vector.extract_strided_slice %5 {offsets = [0, 0], sizes = [8, 32], strides = [1, 1]} : vector<8x256xf32> to vector<8x32xf32>
    %10 = vector.extract_strided_slice %7 {offsets = [0, 0], sizes = [8, 32], strides = [1, 1]} : vector<8x256xf32> to vector<8x32xf32>
    %cst_10 = arith.constant dense<0.000000e+00> : vector<8x8xf32>
    %11 = tpu.matmul %8, %9, %cst_10 {dimension_numbers = #tpu.dot_dimension_numbers<[1], [1], [0], [0], [0, 0, 1, 0], [], []>} : vector<8x32xf32>, vector<8x32xf32>, vector<8x8xf32> -> vector<8x8xf32>
    %cst_11 = arith.constant dense<0xFF800000> : vector<8xf32>
    %12 = vector.multi_reduction <maximumf>, %11, %cst_11 [1] : vector<8x8xf32> to vector<8xf32>
    %13 = vector.shape_cast %12 : vector<8xf32> to vector<8x1xf32>
    %14 = vector.broadcast %13 : vector<8x1xf32> to vector<8x8xf32>
    %15 = arith.subf %11, %14 : vector<8x8xf32>
    %16 = math.exp %15 : vector<8x8xf32>
    %cst_12 = arith.constant dense<0.000000e+00> : vector<8xf32>
    %17 = vector.multi_reduction <add>, %16, %cst_12 [1] : vector<8x8xf32> to vector<8xf32>
    %18 = vector.shape_cast %17 : vector<8xf32> to vector<8x1xf32>
    %19 = tpu.reciprocal %18 {approx = true} : vector<8x1xf32> -> vector<8x1xf32>
    %20 = vector.broadcast %19 : vector<8x1xf32> to vector<8x8xf32>
    %21 = arith.mulf %16, %20 : vector<8x8xf32>
    %cst_13 = arith.constant dense<0.000000e+00> : vector<8x32xf32>
    %22 = tpu.matmul %21, %10, %cst_13 {dimension_numbers = #tpu.dot_dimension_numbers<[1], [0], [0], [1], [0, 0, 1, 1], [], []>} : vector<8x8xf32>, vector<8x32xf32>, vector<8x32xf32> -> vector<8x32xf32>
    %23 = vector.extract_strided_slice %3 {offsets = [0, 32], sizes = [8, 32], strides = [1, 1]} : vector<8x256xf32> to vector<8x32xf32>
    %24 = vector.extract_strided_slice %5 {offsets = [0, 32], sizes = [8, 32], strides = [1, 1]} : vector<8x256xf32> to vector<8x32xf32>
    %25 = vector.extract_strided_slice %7 {offsets = [0, 32], sizes = [8, 32], strides = [1, 1]} : vector<8x256xf32> to vector<8x32xf32>
    %cst_14 = arith.constant dense<0.000000e+00> : vector<8x8xf32>
    %26 = tpu.matmul %23, %24, %cst_14 {dimension_numbers = #tpu.dot_dimension_numbers<[1], [1], [0], [0], [0, 0, 1, 0], [], []>} : vector<8x32xf32>, vector<8x32xf32>, vector<8x8xf32> -> vector<8x8xf32>
    %cst_15 = arith.constant dense<0xFF800000> : vector<8xf32>
    %27 = vector.multi_reduction <maximumf>, %26, %cst_15 [1] : vector<8x8xf32> to vector<8xf32>
    %28 = vector.shape_cast %27 : vector<8xf32> to vector<8x1xf32>
    %29 = vector.broadcast %28 : vector<8x1xf32> to vector<8x8xf32>
    %30 = arith.subf %26, %29 : vector<8x8xf32>
    %31 = math.exp %30 : vector<8x8xf32>
    %cst_16 = arith.constant dense<0.000000e+00> : vector<8xf32>
    %32 = vector.multi_reduction <add>, %31, %cst_16 [1] : vector<8x8xf32> to vector<8xf32>
    %33 = vector.shape_cast %32 : vector<8xf32> to vector<8x1xf32>
    %34 = tpu.reciprocal %33 {approx = true} : vector<8x1xf32> -> vector<8x1xf32>
    %35 = vector.broadcast %34 : vector<8x1xf32> to vector<8x8xf32>
    %36 = arith.mulf %31, %35 : vector<8x8xf32>
    %cst_17 = arith.constant dense<0.000000e+00> : vector<8x32xf32>
    %37 = tpu.matmul %36, %25, %cst_17 {dimension_numbers = #tpu.dot_dimension_numbers<[1], [0], [0], [1], [0, 0, 1, 1], [], []>} : vector<8x8xf32>, vector<8x32xf32>, vector<8x32xf32> -> vector<8x32xf32>
    %38 = vector.extract_strided_slice %3 {offsets = [0, 64], sizes = [8, 32], strides = [1, 1]} : vector<8x256xf32> to vector<8x32xf32>
    %39 = vector.extract_strided_slice %5 {offsets = [0, 64], sizes = [8, 32], strides = [1, 1]} : vector<8x256xf32> to vector<8x32xf32>
    %40 = vector.extract_strided_slice %7 {offsets = [0, 64], sizes = [8, 32], strides = [1, 1]} : vector<8x256xf32> to vector<8x32xf32>
    %cst_18 = arith.constant dense<0.000000e+00> : vector<8x8xf32>
    %41 = tpu.matmul %38, %39, %cst_18 {dimension_numbers = #tpu.dot_dimension_numbers<[1], [1], [0], [0], [0, 0, 1, 0], [], []>} : vector<8x32xf32>, vector<8x32xf32>, vector<8x8xf32> -> vector<8x8xf32>
    %cst_19 = arith.constant dense<0xFF800000> : vector<8xf32>
    %42 = vector.multi_reduction <maximumf>, %41, %cst_19 [1] : vector<8x8xf32> to vector<8xf32>
    %43 = vector.shape_cast %42 : vector<8xf32> to vector<8x1xf32>
    %44 = vector.broadcast %43 : vector<8x1xf32> to vector<8x8xf32>
    %45 = arith.subf %41, %44 : vector<8x8xf32>
    %46 = math.exp %45 : vector<8x8xf32>
    %cst_20 = arith.constant dense<0.000000e+00> : vector<8xf32>
    %47 = vector.multi_reduction <add>, %46, %cst_20 [1] : vector<8x8xf32> to vector<8xf32>
    %48 = vector.shape_cast %47 : vector<8xf32> to vector<8x1xf32>
    %49 = tpu.reciprocal %48 {approx = true} : vector<8x1xf32> -> vector<8x1xf32>
    %50 = vector.broadcast %49 : vector<8x1xf32> to vector<8x8xf32>
    %51 = arith.mulf %46, %50 : vector<8x8xf32>
    %cst_21 = arith.constant dense<0.000000e+00> : vector<8x32xf32>
    %52 = tpu.matmul %51, %40, %cst_21 {dimension_numbers = #tpu.dot_dimension_numbers<[1], [0], [0], [1], [0, 0, 1, 1], [], []>} : vector<8x8xf32>, vector<8x32xf32>, vector<8x32xf32> -> vector<8x32xf32>
    %53 = vector.extract_strided_slice %3 {offsets = [0, 96], sizes = [8, 32], strides = [1, 1]} : vector<8x256xf32> to vector<8x32xf32>
    %54 = vector.extract_strided_slice %5 {offsets = [0, 96], sizes = [8, 32], strides = [1, 1]} : vector<8x256xf32> to vector<8x32xf32>
    %55 = vector.extract_strided_slice %7 {offsets = [0, 96], sizes = [8, 32], strides = [1, 1]} : vector<8x256xf32> to vector<8x32xf32>
    %cst_22 = arith.constant dense<0.000000e+00> : vector<8x8xf32>
    %56 = tpu.matmul %53, %54, %cst_22 {dimension_numbers = #tpu.dot_dimension_numbers<[1], [1], [0], [0], [0, 0, 1, 0], [], []>} : vector<8x32xf32>, vector<8x32xf32>, vector<8x8xf32> -> vector<8x8xf32>
    %cst_23 = arith.constant dense<0xFF800000> : vector<8xf32>
    %57 = vector.multi_reduction <maximumf>, %56, %cst_23 [1] : vector<8x8xf32> to vector<8xf32>
    %58 = vector.shape_cast %57 : vector<8xf32> to vector<8x1xf32>
    %59 = vector.broadcast %58 : vector<8x1xf32> to vector<8x8xf32>
    %60 = arith.subf %56, %59 : vector<8x8xf32>
    %61 = math.exp %60 : vector<8x8xf32>
    %cst_24 = arith.constant dense<0.000000e+00> : vector<8xf32>
    %62 = vector.multi_reduction <add>, %61, %cst_24 [1] : vector<8x8xf32> to vector<8xf32>
    %63 = vector.shape_cast %62 : vector<8xf32> to vector<8x1xf32>
    %64 = tpu.reciprocal %63 {approx = true} : vector<8x1xf32> -> vector<8x1xf32>
    %65 = vector.broadcast %64 : vector<8x1xf32> to vector<8x8xf32>
    %66 = arith.mulf %61, %65 : vector<8x8xf32>
    %cst_25 = arith.constant dense<0.000000e+00> : vector<8x32xf32>
    %67 = tpu.matmul %66, %55, %cst_25 {dimension_numbers = #tpu.dot_dimension_numbers<[1], [0], [0], [1], [0, 0, 1, 1], [], []>} : vector<8x8xf32>, vector<8x32xf32>, vector<8x32xf32> -> vector<8x32xf32>
    %68 = vector.extract_strided_slice %3 {offsets = [0, 128], sizes = [8, 32], strides = [1, 1]} : vector<8x256xf32> to vector<8x32xf32>
    %69 = vector.extract_strided_slice %5 {offsets = [0, 128], sizes = [8, 32], strides = [1, 1]} : vector<8x256xf32> to vector<8x32xf32>
    %70 = vector.extract_strided_slice %7 {offsets = [0, 128], sizes = [8, 32], strides = [1, 1]} : vector<8x256xf32> to vector<8x32xf32>
    %cst_26 = arith.constant dense<0.000000e+00> : vector<8x8xf32>
    %71 = tpu.matmul %68, %69, %cst_26 {dimension_numbers = #tpu.dot_dimension_numbers<[1], [1], [0], [0], [0, 0, 1, 0], [], []>} : vector<8x32xf32>, vector<8x32xf32>, vector<8x8xf32> -> vector<8x8xf32>
    %cst_27 = arith.constant dense<0xFF800000> : vector<8xf32>
    %72 = vector.multi_reduction <maximumf>, %71, %cst_27 [1] : vector<8x8xf32> to vector<8xf32>
    %73 = vector.shape_cast %72 : vector<8xf32> to vector<8x1xf32>
    %74 = vector.broadcast %73 : vector<8x1xf32> to vector<8x8xf32>
    %75 = arith.subf %71, %74 : vector<8x8xf32>
    %76 = math.exp %75 : vector<8x8xf32>
    %cst_28 = arith.constant dense<0.000000e+00> : vector<8xf32>
    %77 = vector.multi_reduction <add>, %76, %cst_28 [1] : vector<8x8xf32> to vector<8xf32>
    %78 = vector.shape_cast %77 : vector<8xf32> to vector<8x1xf32>
    %79 = tpu.reciprocal %78 {approx = true} : vector<8x1xf32> -> vector<8x1xf32>
    %80 = vector.broadcast %79 : vector<8x1xf32> to vector<8x8xf32>
    %81 = arith.mulf %76, %80 : vector<8x8xf32>
    %cst_29 = arith.constant dense<0.000000e+00> : vector<8x32xf32>
    %82 = tpu.matmul %81, %70, %cst_29 {dimension_numbers = #tpu.dot_dimension_numbers<[1], [0], [0], [1], [0, 0, 1, 1], [], []>} : vector<8x8xf32>, vector<8x32xf32>, vector<8x32xf32> -> vector<8x32xf32>
    %83 = vector.extract_strided_slice %3 {offsets = [0, 160], sizes = [8, 32], strides = [1, 1]} : vector<8x256xf32> to vector<8x32xf32>
    %84 = vector.extract_strided_slice %5 {offsets = [0, 160], sizes = [8, 32], strides = [1, 1]} : vector<8x256xf32> to vector<8x32xf32>
    %85 = vector.extract_strided_slice %7 {offsets = [0, 160], sizes = [8, 32], strides = [1, 1]} : vector<8x256xf32> to vector<8x32xf32>
    %cst_30 = arith.constant dense<0.000000e+00> : vector<8x8xf32>
    %86 = tpu.matmul %83, %84, %cst_30 {dimension_numbers = #tpu.dot_dimension_numbers<[1], [1], [0], [0], [0, 0, 1, 0], [], []>} : vector<8x32xf32>, vector<8x32xf32>, vector<8x8xf32> -> vector<8x8xf32>
    %cst_31 = arith.constant dense<0xFF800000> : vector<8xf32>
    %87 = vector.multi_reduction <maximumf>, %86, %cst_31 [1] : vector<8x8xf32> to vector<8xf32>
    %88 = vector.shape_cast %87 : vector<8xf32> to vector<8x1xf32>
    %89 = vector.broadcast %88 : vector<8x1xf32> to vector<8x8xf32>
    %90 = arith.subf %86, %89 : vector<8x8xf32>
    %91 = math.exp %90 : vector<8x8xf32>
    %cst_32 = arith.constant dense<0.000000e+00> : vector<8xf32>
    %92 = vector.multi_reduction <add>, %91, %cst_32 [1] : vector<8x8xf32> to vector<8xf32>
    %93 = vector.shape_cast %92 : vector<8xf32> to vector<8x1xf32>
    %94 = tpu.reciprocal %93 {approx = true} : vector<8x1xf32> -> vector<8x1xf32>
    %95 = vector.broadcast %94 : vector<8x1xf32> to vector<8x8xf32>
    %96 = arith.mulf %91, %95 : vector<8x8xf32>
    %cst_33 = arith.constant dense<0.000000e+00> : vector<8x32xf32>
    %97 = tpu.matmul %96, %85, %cst_33 {dimension_numbers = #tpu.dot_dimension_numbers<[1], [0], [0], [1], [0, 0, 1, 1], [], []>} : vector<8x8xf32>, vector<8x32xf32>, vector<8x32xf32> -> vector<8x32xf32>
    %98 = vector.extract_strided_slice %3 {offsets = [0, 192], sizes = [8, 32], strides = [1, 1]} : vector<8x256xf32> to vector<8x32xf32>
    %99 = vector.extract_strided_slice %5 {offsets = [0, 192], sizes = [8, 32], strides = [1, 1]} : vector<8x256xf32> to vector<8x32xf32>
    %100 = vector.extract_strided_slice %7 {offsets = [0, 192], sizes = [8, 32], strides = [1, 1]} : vector<8x256xf32> to vector<8x32xf32>
    %cst_34 = arith.constant dense<0.000000e+00> : vector<8x8xf32>
    %101 = tpu.matmul %98, %99, %cst_34 {dimension_numbers = #tpu.dot_dimension_numbers<[1], [1], [0], [0], [0, 0, 1, 0], [], []>} : vector<8x32xf32>, vector<8x32xf32>, vector<8x8xf32> -> vector<8x8xf32>
    %cst_35 = arith.constant dense<0xFF800000> : vector<8xf32>
    %102 = vector.multi_reduction <maximumf>, %101, %cst_35 [1] : vector<8x8xf32> to vector<8xf32>
    %103 = vector.shape_cast %102 : vector<8xf32> to vector<8x1xf32>
    %104 = vector.broadcast %103 : vector<8x1xf32> to vector<8x8xf32>
    %105 = arith.subf %101, %104 : vector<8x8xf32>
    %106 = math.exp %105 : vector<8x8xf32>
    %cst_36 = arith.constant dense<0.000000e+00> : vector<8xf32>
    %107 = vector.multi_reduction <add>, %106, %cst_36 [1] : vector<8x8xf32> to vector<8xf32>
    %108 = vector.shape_cast %107 : vector<8xf32> to vector<8x1xf32>
    %109 = tpu.reciprocal %108 {approx = true} : vector<8x1xf32> -> vector<8x1xf32>
    %110 = vector.broadcast %109 : vector<8x1xf32> to vector<8x8xf32>
    %111 = arith.mulf %106, %110 : vector<8x8xf32>
    %cst_37 = arith.constant dense<0.000000e+00> : vector<8x32xf32>
    %112 = tpu.matmul %111, %100, %cst_37 {dimension_numbers = #tpu.dot_dimension_numbers<[1], [0], [0], [1], [0, 0, 1, 1], [], []>} : vector<8x8xf32>, vector<8x32xf32>, vector<8x32xf32> -> vector<8x32xf32>
    %113 = vector.extract_strided_slice %3 {offsets = [0, 224], sizes = [8, 32], strides = [1, 1]} : vector<8x256xf32> to vector<8x32xf32>
    %114 = vector.extract_strided_slice %5 {offsets = [0, 224], sizes = [8, 32], strides = [1, 1]} : vector<8x256xf32> to vector<8x32xf32>
    %115 = vector.extract_strided_slice %7 {offsets = [0, 224], sizes = [8, 32], strides = [1, 1]} : vector<8x256xf32> to vector<8x32xf32>
    %cst_38 = arith.constant dense<0.000000e+00> : vector<8x8xf32>
    %116 = tpu.matmul %113, %114, %cst_38 {dimension_numbers = #tpu.dot_dimension_numbers<[1], [1], [0], [0], [0, 0, 1, 0], [], []>} : vector<8x32xf32>, vector<8x32xf32>, vector<8x8xf32> -> vector<8x8xf32>
    %cst_39 = arith.constant dense<0xFF800000> : vector<8xf32>
    %117 = vector.multi_reduction <maximumf>, %116, %cst_39 [1] : vector<8x8xf32> to vector<8xf32>
    %118 = vector.shape_cast %117 : vector<8xf32> to vector<8x1xf32>
    %119 = vector.broadcast %118 : vector<8x1xf32> to vector<8x8xf32>
    %120 = arith.subf %116, %119 : vector<8x8xf32>
    %121 = math.exp %120 : vector<8x8xf32>
    %cst_40 = arith.constant dense<0.000000e+00> : vector<8xf32>
    %122 = vector.multi_reduction <add>, %121, %cst_40 [1] : vector<8x8xf32> to vector<8xf32>
    %123 = vector.shape_cast %122 : vector<8xf32> to vector<8x1xf32>
    %124 = tpu.reciprocal %123 {approx = true} : vector<8x1xf32> -> vector<8x1xf32>
    %125 = vector.broadcast %124 : vector<8x1xf32> to vector<8x8xf32>
    %126 = arith.mulf %121, %125 : vector<8x8xf32>
    %cst_41 = arith.constant dense<0.000000e+00> : vector<8x32xf32>
    %127 = tpu.matmul %126, %115, %cst_41 {dimension_numbers = #tpu.dot_dimension_numbers<[1], [0], [0], [1], [0, 0, 1, 1], [], []>} : vector<8x8xf32>, vector<8x32xf32>, vector<8x32xf32> -> vector<8x32xf32>
    %128 = tpu.concatenate %22, %37, %52, %67, %82, %97, %112, %127 in 1 : vector<8x32xf32>, vector<8x32xf32>, vector<8x32xf32>, vector<8x32xf32>, vector<8x32xf32>, vector<8x32xf32>, vector<8x32xf32>, vector<8x32xf32> -> vector<8x256xf32>
    %c0_42 = arith.constant 0 : index
    %c0_43 = arith.constant 0 : index
    %129 = vector.load %arg5[%c0_42, %c0_43] : memref<256x32xf32, #tpu.memory_space<vmem>>, vector<256x32xf32>
    %cst_44 = arith.constant dense<0.000000e+00> : vector<8x32xf32>
    %130 = tpu.matmul %128, %129, %cst_44 {dimension_numbers = #tpu.dot_dimension_numbers<[1], [0], [0], [1], [0, 0, 1, 1], [], []>} : vector<8x256xf32>, vector<256x32xf32>, vector<8x32xf32> -> vector<8x32xf32>
    %c0_45 = arith.constant 0 : index
    %c0_46 = arith.constant 0 : index
    %131 = vector.load %arg6[%c0_45, %c0_46] : memref<1x32xf32, #tpu.memory_space<vmem>>, vector<1x32xf32>
    %132 = vector.broadcast %131 : vector<1x32xf32> to vector<8x32xf32>
    %133 = arith.addf %130, %132 : vector<8x32xf32>
    %c0_47 = arith.constant 0 : index
    %c0_48 = arith.constant 0 : index
    %c0_49 = arith.constant 0 : index
    %134 = vector.load %arg7[%c0_47, %c0_48, %c0_49] : memref<1x8x32xf32, #tpu.memory_space<vmem>>, vector<1x8x32xf32>
    %135 = vector.shape_cast %134 : vector<1x8x32xf32> to vector<8x32xf32>
    %136 = vector.shape_cast %133 : vector<8x32xf32> to vector<1x8x32xf32>
    tpu.vector_store %arg7[%c0_47, %c0_48, %c0_49], %136 {strides = array<i32>} : memref<1x8x32xf32, #tpu.memory_space<vmem>>, vector<1x8x32xf32>,
    return
  }
  func.func @transform_0(%arg0: i32) -> (i32, i32, i32) {
    %c0_i32 = arith.constant 0 : i32
    %c0_i32_0 = arith.constant 0 : i32
    %c0_i32_1 = arith.constant 0 : i32
    return %arg0, %c0_i32, %c0_i32_0 : i32, i32, i32
  }
  func.func @transform_1(%arg0: i32) -> (i32, i32) {
    %c0_i32 = arith.constant 0 : i32
    %c0_i32_0 = arith.constant 0 : i32
    %c0_i32_1 = arith.constant 0 : i32
    return %c0_i32, %c0_i32_0 : i32, i32
  }
  func.func @transform_2(%arg0: i32) -> (i32, i32) {
    %c0_i32 = arith.constant 0 : i32
    %c0_i32_0 = arith.constant 0 : i32
    %c0_i32_1 = arith.constant 0 : i32
    return %c0_i32, %c0_i32_0 : i32, i32
  }
  func.func @transform_3(%arg0: i32) -> (i32, i32) {
    %c0_i32 = arith.constant 0 : i32
    %c0_i32_0 = arith.constant 0 : i32
    %c0_i32_1 = arith.constant 0 : i32
    return %c0_i32, %c0_i32_0 : i32, i32
  }
  func.func @transform_4(%arg0: i32) -> (i32, i32) {
    %c0_i32 = arith.constant 0 : i32
    %c0_i32_0 = arith.constant 0 : i32
    %c0_i32_1 = arith.constant 0 : i32
    return %c0_i32, %c0_i32_0 : i32, i32
  }
  func.func @transform_5(%arg0: i32) -> (i32, i32) {
    %c0_i32 = arith.constant 0 : i32
    %c0_i32_0 = arith.constant 0 : i32
    %c0_i32_1 = arith.constant 0 : i32
    return %c0_i32, %c0_i32_0 : i32, i32
  }
  func.func @transform_6(%arg0: i32) -> (i32, i32, i32) {
    %c0_i32 = arith.constant 0 : i32
    %c0_i32_0 = arith.constant 0 : i32
    %c0_i32_1 = arith.constant 0 : i32
    return %arg0, %c0_i32, %c0_i32_0 : i32, i32, i32
  }
}

</mosaic_0001>

<llo_original>
// kernel: attention_layer.1
$region0: #{attention_layer.1}
  #allocation0 [shape = 'u32[]', space=smem, size = 0x4, offset = 0x4, fixed_abs, tag = 'smem constant byte address 0x4 - core index']
  #allocation1 [shape = 'u32[144,128]{1,0:T(1,128)}', space=vmem, size = 0x12000, scoped, tag = 'internal scratch']
  %s0 = inlined_call_operand.vmem [shape: f32[2,8,32], index: 0, kind: input, shape index: {}]
  %s1 = inlined_call_operand.vmem [shape: f32[32,256], index: 1, kind: input, shape index: {}]
  %s2 = inlined_call_operand.vmem [shape: f32[32,256], index: 2, kind: input, shape index: {}]
  %s3 = inlined_call_operand.vmem [shape: f32[32,256], index: 3, kind: input, shape index: {}]
  %s4 = inlined_call_operand.vmem [shape: f32[256,32], index: 4, kind: input, shape index: {}]
  %s5 = inlined_call_operand.vmem [shape: f32[1,32], index: 5, kind: input, shape index: {}]
  %s6 = inlined_call_operand.hbm [shape: f32[2,8,32], index: 6, kind: output, shape index: {}]
  %s7 = sld [smem:[#allocation0]]
  $region57: #{attention_layer.1} parent=0
    _
  %s9 = ssub.s32 1, %s7
  %s10 = scalar_select 0, %s9, %s7
  $region1: #{attention_layer.1} parent=0
    #allocation2 [shape = 'u8[8192]{0}', space=vmem, size = 0x2000, scoped, tag = 'output window, operand 0']
    #allocation3 [shape = 's32[2]{0}', space=sflag, size = 0x8, scoped, tag = 'scoped memory for attention_layer.1']
    %11 = vsyncpa [#allocation3], 0
    %s12 = scalar_lea.sflag [#allocation3], 1
    %13 = vsyncpa %s12, 0
    loop: start=0, step=1, limit=4
    $region2: #{attention_layer.1} parent=1 // loop_pre_header
      _
    $region3: #{attention_layer.1} parent=1 // loop_header
      %s15 = sphi 0, %s19
      %p16 = scmp.ge.s32.totalorder %s15, 4
      %s25 = sphi 0, %s27
      %s28 = sphi 0, %s25
      %s29 = sphi 0, %s28
      %s45 = sphi 0, %s29
      %s49 = sphi 0, %s49
      %s51 = sphi 0, %s49
      %s52 = sphi 0, %s51
      %s66 = sphi 0, %s52
      %s70 = sphi 0, %s70
      %s72 = sphi 0, %s70
      %s73 = sphi 0, %s72
      %s87 = sphi 0, %s73
      %s91 = sphi 0, %s91
      %s93 = sphi 0, %s91
      %s94 = sphi 0, %s93
      %s108 = sphi 0, %s94
      %s112 = sphi 0, %s112
      %s114 = sphi 0, %s112
      %s115 = sphi 0, %s114
      %s129 = sphi 0, %s115
      %s133 = sphi 0, %s133
      %s135 = sphi 0, %s133
      %s136 = sphi 0, %s135
      %s150 = sphi 0, %s136
      %s156 = sphi 0, %s158
      %s159 = sphi 0, %s156
      %s160 = sphi 0, %s159
      %s176 = sphi 0, %s160
    $region4: #{attention_layer.1} parent=1 // loop_header_branch
      %18 = sbr.rel (%p16) target = $region8
    $region5: #{attention_layer.1} parent=1 // loop_body
      %s20 = ssub.s32 %s15, 1
      %s21 = ssub.s32 %s15, 2
      %s22 = sadd.s32 %s15, 1
      %s23 = ssub.s32 %s15, %s22
      %p24 = scmp.eq.s32.totalorder %s23, 0
      %s26 = sadd.s32 %s25, 1
      %s27 = scalar_select %p24, %s25, %s26
      %p30 = pneg %p24
      %p31 = scmp.eq.s32.totalorder %s15, 1
      %p32 = por %p30, %p31
      %p33 = scmp.ne.s32.totalorder %s25, %s28
      %p34 = scmp.eq.s32.totalorder %s15, 0
      %p35 = por %p33, %p34
      %p36 = scmp.ne.s32.totalorder %s25, %s28
      %p37 = scmp.eq.s32.totalorder %s20, 1
      %p38 = por %p36, %p37
      %p39 = scmp.ne.s32.totalorder %s28, %s29
      %p40 = scmp.eq.s32.totalorder %s20, 0
      %p41 = por %p39, %p40
      %p42 = scmp.ne.s32.totalorder %s28, %s29
      %p43 = scmp.eq.s32.totalorder %s21, 1
      %p44 = por %p42, %p43
      %p46 = scmp.ne.s32.totalorder %s29, %s45
      %p47 = scmp.eq.s32.totalorder %s21, 0
      %p48 = por %p46, %p47
      %s50 = sadd.s32 %s49, 1
      %p53 = scmp.eq.s32.totalorder %s15, 1
      %p54 = scmp.ne.s32.totalorder %s49, %s51
      %p55 = scmp.eq.s32.totalorder %s15, 0
      %p56 = por %p54, %p55
      %p57 = scmp.ne.s32.totalorder %s49, %s51
      %p58 = scmp.eq.s32.totalorder %s20, 1
      %p59 = por %p57, %p58
      %p60 = scmp.ne.s32.totalorder %s51, %s52
      %p61 = scmp.eq.s32.totalorder %s20, 0
      %p62 = por %p60, %p61
      %p63 = scmp.ne.s32.totalorder %s51, %s52
      %p64 = scmp.eq.s32.totalorder %s21, 1
      %p65 = por %p63, %p64
      %p67 = scmp.ne.s32.totalorder %s52, %s66
      %p68 = scmp.eq.s32.totalorder %s21, 0
      %p69 = por %p67, %p68
      %s71 = sadd.s32 %s70, 1
      %p74 = scmp.eq.s32.totalorder %s15, 1
      %p75 = scmp.ne.s32.totalorder %s70, %s72
      %p76 = scmp.eq.s32.totalorder %s15, 0
      %p77 = por %p75, %p76
      %p78 = scmp.ne.s32.totalorder %s70, %s72
      %p79 = scmp.eq.s32.totalorder %s20, 1
      %p80 = por %p78, %p79
      %p81 = scmp.ne.s32.totalorder %s72, %s73
      %p82 = scmp.eq.s32.totalorder %s20, 0
      %p83 = por %p81, %p82
      %p84 = scmp.ne.s32.totalorder %s72, %s73
      %p85 = scmp.eq.s32.totalorder %s21, 1
      %p86 = por %p84, %p85
      %p88 = scmp.ne.s32.totalorder %s73, %s87
      %p89 = scmp.eq.s32.totalorder %s21, 0
      %p90 = por %p88, %p89
      %s92 = sadd.s32 %s91, 1
      %p95 = scmp.eq.s32.totalorder %s15, 1
      %p96 = scmp.ne.s32.totalorder %s91, %s93
      %p97 = scmp.eq.s32.totalorder %s15, 0
      %p98 = por %p96, %p97
      %p99 = scmp.ne.s32.totalorder %s91, %s93
      %p100 = scmp.eq.s32.totalorder %s20, 1
      %p101 = por %p99, %p100
      %p102 = scmp.ne.s32.totalorder %s93, %s94
      %p103 = scmp.eq.s32.totalorder %s20, 0
      %p104 = por %p102, %p103
      %p105 = scmp.ne.s32.totalorder %s93, %s94
      %p106 = scmp.eq.s32.totalorder %s21, 1
      %p107 = por %p105, %p106
      %p109 = scmp.ne.s32.totalorder %s94, %s108
      %p110 = scmp.eq.s32.totalorder %s21, 0
      %p111 = por %p109, %p110
      %s113 = sadd.s32 %s112, 1
      %p116 = scmp.eq.s32.totalorder %s15, 1
      %p117 = scmp.ne.s32.totalorder %s112, %s114
      %p118 = scmp.eq.s32.totalorder %s15, 0
      %p119 = por %p117, %p118
      %p120 = scmp.ne.s32.totalorder %s112, %s114
      %p121 = scmp.eq.s32.totalorder %s20, 1
      %p122 = por %p120, %p121
      %p123 = scmp.ne.s32.totalorder %s114, %s115
      %p124 = scmp.eq.s32.totalorder %s20, 0
      %p125 = por %p123, %p124
      %p126 = scmp.ne.s32.totalorder %s114, %s115
      %p127 = scmp.eq.s32.totalorder %s21, 1
      %p128 = por %p126, %p127
      %p130 = scmp.ne.s32.totalorder %s115, %s129
      %p131 = scmp.eq.s32.totalorder %s21, 0
      %p132 = por %p130, %p131
      %s134 = sadd.s32 %s133, 1
      %p137 = scmp.eq.s32.totalorder %s15, 1
      %p138 = scmp.ne.s32.totalorder %s133, %s135
      %p139 = scmp.eq.s32.totalorder %s15, 0
      %p140 = por %p138, %p139
      %p141 = scmp.ne.s32.totalorder %s133, %s135
      %p142 = scmp.eq.s32.totalorder %s20, 1
      %p143 = por %p141, %p142
      %p144 = scmp.ne.s32.totalorder %s135, %s136
      %p145 = scmp.eq.s32.totalorder %s20, 0
      %p146 = por %p144, %p145
      %p147 = scmp.ne.s32.totalorder %s135, %s136
      %p148 = scmp.eq.s32.totalorder %s21, 1
      %p149 = por %p147, %p148
      %p151 = scmp.ne.s32.totalorder %s136, %s150
      %p152 = scmp.eq.s32.totalorder %s21, 0
      %p153 = por %p151, %p152
      %s154 = ssub.s32 %s15, %s22
      %p155 = scmp.eq.s32.totalorder %s154, 0
      %s157 = sadd.s32 %s156, 1
      %s158 = scalar_select %p155, %s156, %s157
      %p161 = pneg %p155
      %p162 = scmp.eq.s32.totalorder %s15, 1
      %p163 = por %p161, %p162
      %p164 = scmp.ne.s32.totalorder %s156, %s159
      %p165 = scmp.eq.s32.totalorder %s15, 0
      %p166 = por %p164, %p165
      %p167 = scmp.ne.s32.totalorder %s156, %s159
      %p168 = scmp.eq.s32.totalorder %s20, 1
      %p169 = por %p167, %p168
      %p170 = scmp.ne.s32.totalorder %s159, %s160
      %p171 = scmp.eq.s32.totalorder %s20, 0
      %p172 = por %p170, %p171
      %p173 = scmp.ne.s32.totalorder %s159, %s160
      %p174 = scmp.eq.s32.totalorder %s21, 1
      %p175 = por %p173, %p174
      %p177 = scmp.ne.s32.totalorder %s160, %s176
      %p178 = scmp.eq.s32.totalorder %s21, 0
      %p179 = por %p177, %p178
      %p180 = scmp.le.s32.totalorder 1, %s15
      %p181 = scmp.lt.s32.totalorder %s15, 3
      %p182 = pnand %p180, %p181
      %p183 = pneg %p182
      // Predicated region
      $region9: #{attention_layer.1} parent=5 // pred_check
        _
      $region10: #{attention_layer.1} parent=5 // pred_check_branch
        %185 = sbr.rel (%p182) target = $region12
      $region11: #{attention_layer.1} parent=5 // pred_region
        %s186 = ssub.s32 %s15, 1
        // Predicated region
        $region13: #{attention_layer.1} parent=11 // pred_check
          %p187 = pneg %p62
        $region14: #{attention_layer.1} parent=11 // pred_check_branch
          %189 = sbr.rel (%p187) target = $region16
        $region15: #{attention_layer.1} parent=11 // pred_region
          _
        $region16: #{attention_layer.1} parent=11 // pred_fallthru
          _
        // Predicated region
        $region17: #{attention_layer.1} parent=11 // pred_check
          %p190 = pneg %p83
        $region18: #{attention_layer.1} parent=11 // pred_check_branch
          %192 = sbr.rel (%p190) target = $region20
        $region19: #{attention_layer.1} parent=11 // pred_region
          _
        $region20: #{attention_layer.1} parent=11 // pred_fallthru
          _
        // Predicated region
        $region21: #{attention_layer.1} parent=11 // pred_check
          %p193 = pneg %p104
        $region22: #{attention_layer.1} parent=11 // pred_check_branch
          %195 = sbr.rel (%p193) target = $region24
        $region23: #{attention_layer.1} parent=11 // pred_region
          _
        $region24: #{attention_layer.1} parent=11 // pred_fallthru
          _
        // Predicated region
        $region25: #{attention_layer.1} parent=11 // pred_check
          %p196 = pneg %p125
        $region26: #{attention_layer.1} parent=11 // pred_check_branch
          %198 = sbr.rel (%p196) target = $region28
        $region27: #{attention_layer.1} parent=11 // pred_region
          _
        $region28: #{attention_layer.1} parent=11 // pred_fallthru
          _
        // Predicated region
        $region29: #{attention_layer.1} parent=11 // pred_check
          %p199 = pneg %p146
        $region30: #{attention_layer.1} parent=11 // pred_check_branch
          %201 = sbr.rel (%p199) target = $region32
        $region31: #{attention_layer.1} parent=11 // pred_region
          _
        $region32: #{attention_layer.1} parent=11 // pred_fallthru
          _
      $region12: #{attention_layer.1} parent=5 // pred_fallthru
        _
      %p202 = scmp.lt.s32.totalorder %s15, 2
      // Predicated region
      $region33: #{attention_layer.1} parent=5 // pred_check
        %p203 = pneg %p202
      $region34: #{attention_layer.1} parent=5 // pred_check_branch
        %205 = sbr.rel (%p203) target = $region36
      $region35: #{attention_layer.1} parent=5 // pred_region
        // Predicated region
        $region37: #{attention_layer.1} parent=35 // pred_check
          %p206 = pneg %p35
        $region38: #{attention_layer.1} parent=35 // pred_check_branch
          %208 = sbr.rel (%p206) target = $region40
        $region39: #{attention_layer.1} parent=35 // pred_region
          %p209 = scmp.lt.s32.totalorder %s15, 1
          %s210 = scalar_select %p209, %s15, 1
          %s211 = smul.addr %s210, 8
          %s212 = scalar_lea.vmem %s0, %s211
        $region40: #{attention_layer.1} parent=35 // pred_fallthru
          _
      $region36: #{attention_layer.1} parent=5 // pred_fallthru
        _
      %p213 = scmp.le.s32.totalorder 1, %s15
      %p214 = scmp.lt.s32.totalorder %s15, 3
      %p215 = pnand %p213, %p214
      %p216 = pneg %p215
      // Predicated region
      $region41: #{attention_layer.1} parent=5 // pred_check
        _
      $region42: #{attention_layer.1} parent=5 // pred_check_branch
        %218 = sbr.rel (%p215) target = $region44
      $region43: #{attention_layer.1} parent=5 // pred_region
        %s219 = ssub.s32 %s15, 1
        %p220 = scmp.lt.s32.totalorder %s20, 1
        %s221 = scalar_select %p220, %s20, 1
        %s222 = smul.addr %s221, 8
        %s223 = scalar_lea.vmem %s0, %s222
        %p224 = pneg %p41
        %p225 = pneg %p38
        %p226 = pneg %p62
        %p227 = pneg %p59
        %p228 = pneg %p83
        %p229 = pneg %p80
        %p230 = pneg %p104
        %p231 = pneg %p101
        %p232 = pneg %p125
        %p233 = pneg %p122
        %p234 = pneg %p146
        %p235 = pneg %p143
        %p236 = pneg %p172
        %p237 = pneg %p169
        %s238 = sand.u32 %s159, 1
        %s239 = scalar_lea.sflag [#allocation3], %s238
        %s240 = sand.u32 %s159, 1
        %s241 = smul.addr %s240, 8
        %s242 = scalar_lea.vmem [#allocation2], %s241
        %p243 = scmp.lt.s32.totalorder %s20, 1
        %s244 = scalar_select %p243, %s20, 1
        %s245 = smul.addr %s244, 8
        %s246 = scalar_lea.vmem %s0, %s245
        %v247 = vld [vmem:[%s246] sm:$0xff]
        %v248 = vld [vmem:[%s1] sm:$0xff]
        %v249 = vld [vmem:[%s1 + $0x8] sm:$0xff]
        %v250 = vld [vmem:[%s1 + $0x10] sm:$0xff]
        %v251 = vld [vmem:[%s1 + $0x18] sm:$0xff]
        %v252 = vld [vmem:[%s1 + $0x20] sm:$0xff]
        %v253 = vld [vmem:[%s1 + $0x28] sm:$0xff]
        %v254 = vld [vmem:[%s1 + $0x30] sm:$0xff]
        %v255 = vld [vmem:[%s1 + $0x38] sm:$0xff]
        %vm256 = vcmask 261120
        %v258 = vsel %vm256, %v247, 0
        %260 = vmatprep.subr.mxu0 %v249
        %261 = vmatpush1.msra.mxu0 %v248
        %262 = vmatprep.subr.mxu0 %v251
        %263 = vmatpush1.msra.mxu0 %v250
        %264 = vmatprep.subr.mxu0 %v253
        %265 = vmatpush1.msra.mxu0 %v252
        %266 = vmatprep.subr.mxu0 %v255
        %267 = vmatpush1.msra.mxu0 %v254
        %268 = vmatprep.subr.mxu0 0.0
        %269 = vmatpush1.msra.mxu0 0.0
        %270 = vmatprep.subr.mxu0 0.0
        %271 = vmatpush1.msra.mxu0 0.0
        %272 = vmatprep.subr.mxu0 0.0
        %273 = vmatpush1.msra.mxu0 0.0
        %274 = vmatprep.subr.mxu0 0.0
        %275 = vmatpush1.msra.mxu0 0.0
        %276 = vmatprep.subr.mxu0 0.0
        %277 = vmatpush1.msra.mxu0 0.0
        %278 = vmatprep.subr.mxu0 0.0
        %279 = vmatpush1.msra.mxu0 0.0
        %280 = vmatprep.subr.mxu0 0.0
        %281 = vmatpush1.msra.mxu0 0.0
        %282 = vmatprep.subr.mxu0 0.0
        %283 = vmatpush1.msra.mxu0 0.0
        %284 = vmatprep.subr.mxu0 0.0
        %285 = vmatpush1.msra.mxu0 0.0
        %286 = vmatprep.subr.mxu0 0.0
        %287 = vmatpush1.msra.mxu0 0.0
        %288 = vmatprep.subr.mxu0 0.0
        %289 = vmatpush1.msra.mxu0 0.0
        %290 = vmatprep.subr.mxu0 0.0
        %291 = vmatpush1.msra.mxu0 0.0
        %292 = vmatprep.subr.mxu0 0.0
        %293 = vmatpush1.msra.mxu0 0.0
        %294 = vmatprep.subr.mxu0 0.0
        %295 = vmatpush1.msra.mxu0 0.0
        %296 = vmatprep.subr.mxu0 0.0
        %297 = vmatpush1.msra.mxu0 0.0
        %298 = vmatprep.subr.mxu0 0.0
        %299 = vmatpush1.msra.mxu0 0.0
        %300 = vmatprep.subr.mxu0 0.0
        %301 = vmatpush1.msra.mxu0 0.0
        %302 = vmatprep.subr.mxu0 0.0
        %303 = vmatpush1.msra.mxu0 0.0
        %304 = vmatprep.subr.mxu0 0.0
        %305 = vmatpush1.msra.mxu0 0.0
        %306 = vmatprep.subr.mxu0 0.0
        %307 = vmatpush1.msra.mxu0 0.0
        %308 = vmatprep.subr.mxu0 0.0
        %309 = vmatpush1.msra.mxu0 0.0
        %310 = vmatprep.subr.mxu0 0.0
        %311 = vmatpush1.msra.mxu0 0.0
        %312 = vmatprep.subr.mxu0 0.0
        %313 = vmatpush1.msra.mxu0 0.0
        %314 = vmatprep.subr.mxu0 0.0
        %315 = vmatpush1.msra.mxu0 0.0
        %316 = vmatprep.subr.mxu0 0.0
        %317 = vmatpush1.msra.mxu0 0.0
        %318 = vmatprep.subr.mxu0 0.0
        %319 = vmatpush1.msra.mxu0 0.0
        %320 = vmatprep.subr.mxu0 0.0
        %321 = vmatpush1.msra.mxu0 0.0
        %322 = vmatprep.subr.mxu0 0.0
        %323 = vmatpush1.msra.mxu0 0.0
        %324 = vmatprep.mubr.f32.mxu0 0.0
        %325 = vmatmul.mubr.f32.gmra.mrb[0].mxu0 %v258
        %v326 = vpop.f32.mrb[0].mxu0
        %v327 = vadd.f32 0.0, %v326
        %v328 = vpop.f32.mrb[0].mxu0
        %v329 = vadd.f32 0.0, %v328
        %330 = vdwg.mxu0
        %v331 = vld [vmem:[%s2] sm:$0xff]
        %v332 = vld [vmem:[%s2 + $0x8] sm:$0xff]
        %v333 = vld [vmem:[%s2 + $0x10] sm:$0xff]
        %v334 = vld [vmem:[%s2 + $0x18] sm:$0xff]
        %v335 = vld [vmem:[%s2 + $0x20] sm:$0xff]
        %v336 = vld [vmem:[%s2 + $0x28] sm:$0xff]
        %v337 = vld [vmem:[%s2 + $0x30] sm:$0xff]
        %v338 = vld [vmem:[%s2 + $0x38] sm:$0xff]
        %339 = vmatprep.subr.mxu0 %v332
        %340 = vmatpush1.msra.mxu0 %v331
        %341 = vmatprep.subr.mxu0 %v334
        %342 = vmatpush1.msra.mxu0 %v333
        %343 = vmatprep.subr.mxu0 %v336
        %344 = vmatpush1.msra.mxu0 %v335
        %345 = vmatprep.subr.mxu0 %v338
        %346 = vmatpush1.msra.mxu0 %v337
        %347 = vmatprep.subr.mxu0 0.0
        %348 = vmatpush1.msra.mxu0 0.0
        %349 = vmatprep.subr.mxu0 0.0
        %350 = vmatpush1.msra.mxu0 0.0
        %351 = vmatprep.subr.mxu0 0.0
        %352 = vmatpush1.msra.mxu0 0.0
        %353 = vmatprep.subr.mxu0 0.0
        %354 = vmatpush1.msra.mxu0 0.0
        %355 = vmatprep.subr.mxu0 0.0
        %356 = vmatpush1.msra.mxu0 0.0
        %357 = vmatprep.subr.mxu0 0.0
        %358 = vmatpush1.msra.mxu0 0.0
        %359 = vmatprep.subr.mxu0 0.0
        %360 = vmatpush1.msra.mxu0 0.0
        %361 = vmatprep.subr.mxu0 0.0
        %362 = vmatpush1.msra.mxu0 0.0
        %363 = vmatprep.subr.mxu0 0.0
        %364 = vmatpush1.msra.mxu0 0.0
        %365 = vmatprep.subr.mxu0 0.0
        %366 = vmatpush1.msra.mxu0 0.0
        %367 = vmatprep.subr.mxu0 0.0
        %368 = vmatpush1.msra.mxu0 0.0
        %369 = vmatprep.subr.mxu0 0.0
        %370 = vmatpush1.msra.mxu0 0.0
        %371 = vmatprep.subr.mxu0 0.0
        %372 = vmatpush1.msra.mxu0 0.0
        %373 = vmatprep.subr.mxu0 0.0
        %374 = vmatpush1.msra.mxu0 0.0
        %375 = vmatprep.subr.mxu0 0.0
        %376 = vmatpush1.msra.mxu0 0.0
        %377 = vmatprep.subr.mxu0 0.0
        %378 = vmatpush1.msra.mxu0 0.0
        %379 = vmatprep.subr.mxu0 0.0
        %380 = vmatpush1.msra.mxu0 0.0
        %381 = vmatprep.subr.mxu0 0.0
        %382 = vmatpush1.msra.mxu0 0.0
        %383 = vmatprep.subr.mxu0 0.0
        %384 = vmatpush1.msra.mxu0 0.0
        %385 = vmatprep.subr.mxu0 0.0
        %386 = vmatpush1.msra.mxu0 0.0
        %387 = vmatprep.subr.mxu0 0.0
        %388 = vmatpush1.msra.mxu0 0.0
        %389 = vmatprep.subr.mxu0 0.0
        %390 = vmatpush1.msra.mxu0 0.0
        %391 = vmatprep.subr.mxu0 0.0
        %392 = vmatpush1.msra.mxu0 0.0
        %393 = vmatprep.subr.mxu0 0.0
        %394 = vmatpush1.msra.mxu0 0.0
        %395 = vmatprep.subr.mxu0 0.0
        %396 = vmatpush1.msra.mxu0 0.0
        %397 = vmatprep.subr.mxu0 0.0
        %398 = vmatpush1.msra.mxu0 0.0
        %399 = vmatprep.subr.mxu0 0.0
        %400 = vmatpush1.msra.mxu0 0.0
        %401 = vmatprep.subr.mxu0 0.0
        %402 = vmatpush1.msra.mxu0 0.0
        %403 = vmatprep.mubr.f32.mxu0 0.0
        %404 = vmatmul.mubr.f32.gmra.mrb[0].mxu0 %v258
        %v405 = vpop.f32.mrb[0].mxu0
        %v406 = vadd.f32 0.0, %v405
        %v407 = vpop.f32.mrb[0].mxu0
        %v408 = vadd.f32 0.0, %v407
        %409 = vdwg.mxu0
        %v410 = vld [vmem:[%s3] sm:$0xff]
        %v411 = vld [vmem:[%s3 + $0x8] sm:$0xff]
        %v412 = vld [vmem:[%s3 + $0x10] sm:$0xff]
        %v413 = vld [vmem:[%s3 + $0x18] sm:$0xff]
        %v414 = vld [vmem:[%s3 + $0x20] sm:$0xff]
        %v415 = vld [vmem:[%s3 + $0x28] sm:$0xff]
        %v416 = vld [vmem:[%s3 + $0x30] sm:$0xff]
        %v417 = vld [vmem:[%s3 + $0x38] sm:$0xff]
        %418 = vmatprep.subr.mxu0 %v411
        %419 = vmatpush1.msra.mxu0 %v410
        %420 = vmatprep.subr.mxu0 %v413
        %421 = vmatpush1.msra.mxu0 %v412
        %422 = vmatprep.subr.mxu0 %v415
        %423 = vmatpush1.msra.mxu0 %v414
        %424 = vmatprep.subr.mxu0 %v417
        %425 = vmatpush1.msra.mxu0 %v416
        %426 = vmatprep.subr.mxu0 0.0
        %427 = vmatpush1.msra.mxu0 0.0
        %428 = vmatprep.subr.mxu0 0.0
        %429 = vmatpush1.msra.mxu0 0.0
        %430 = vmatprep.subr.mxu0 0.0
        %431 = vmatpush1.msra.mxu0 0.0
        %432 = vmatprep.subr.mxu0 0.0
        %433 = vmatpush1.msra.mxu0 0.0
        %434 = vmatprep.subr.mxu0 0.0
        %435 = vmatpush1.msra.mxu0 0.0
        %436 = vmatprep.subr.mxu0 0.0
        %437 = vmatpush1.msra.mxu0 0.0
        %438 = vmatprep.subr.mxu0 0.0
        %439 = vmatpush1.msra.mxu0 0.0
        %440 = vmatprep.subr.mxu0 0.0
        %441 = vmatpush1.msra.mxu0 0.0
        %442 = vmatprep.subr.mxu0 0.0
        %443 = vmatpush1.msra.mxu0 0.0
        %444 = vmatprep.subr.mxu0 0.0
        %445 = vmatpush1.msra.mxu0 0.0
        %446 = vmatprep.subr.mxu0 0.0
        %447 = vmatpush1.msra.mxu0 0.0
        %448 = vmatprep.subr.mxu0 0.0
        %449 = vmatpush1.msra.mxu0 0.0
        %450 = vmatprep.subr.mxu0 0.0
        %451 = vmatpush1.msra.mxu0 0.0
        %452 = vmatprep.subr.mxu0 0.0
        %453 = vmatpush1.msra.mxu0 0.0
        %454 = vmatprep.subr.mxu0 0.0
        %455 = vmatpush1.msra.mxu0 0.0
        %456 = vmatprep.subr.mxu0 0.0
        %457 = vmatpush1.msra.mxu0 0.0
        %458 = vmatprep.subr.mxu0 0.0
        %459 = vmatpush1.msra.mxu0 0.0
        %460 = vmatprep.subr.mxu0 0.0
        %461 = vmatpush1.msra.mxu0 0.0
        %462 = vmatprep.subr.mxu0 0.0
        %463 = vmatpush1.msra.mxu0 0.0
        %464 = vmatprep.subr.mxu0 0.0
        %465 = vmatpush1.msra.mxu0 0.0
        %466 = vmatprep.subr.mxu0 0.0
        %467 = vmatpush1.msra.mxu0 0.0
        %468 = vmatprep.subr.mxu0 0.0
        %469 = vmatpush1.msra.mxu0 0.0
        %470 = vmatprep.subr.mxu0 0.0
        %471 = vmatpush1.msra.mxu0 0.0
        %472 = vmatprep.subr.mxu0 0.0
        %473 = vmatpush1.msra.mxu0 0.0
        %474 = vmatprep.subr.mxu0 0.0
        %475 = vmatpush1.msra.mxu0 0.0
        %476 = vmatprep.subr.mxu0 0.0
        %477 = vmatpush1.msra.mxu0 0.0
        %478 = vmatprep.subr.mxu0 0.0
        %479 = vmatpush1.msra.mxu0 0.0
        %480 = vmatprep.subr.mxu0 0.0
        %481 = vmatpush1.msra.mxu0 0.0
        %482 = vmatprep.mubr.f32.mxu0 0.0
        %483 = vmatmul.mubr.f32.gmra.mrb[0].mxu0 %v258
        %v484 = vpop.f32.mrb[0].mxu0
        %v485 = vadd.f32 0.0, %v484
        %v486 = vpop.f32.mrb[0].mxu0
        %v487 = vadd.f32 0.0, %v486
        %488 = vdwg.mxu0
        %v490 = vsel %vm256, %v327, 0
        %v493 = vsel %vm256, %v406, 0
        %495 = vmatprep.subr.mxu0 0.0
        %496 = vmatpush1.xpose.msra.mxu0 %v493
        %497 = vmatprep.subr.mxu0 0.0
        %498 = vmatpush1.xpose.msra.mxu0 0.0
        %499 = vmatprep.subr.mxu0 0.0
        %500 = vmatpush1.xpose.msra.mxu0 0.0
        %501 = vmatprep.subr.mxu0 0.0
        %502 = vmatpush1.xpose.msra.mxu0 0.0
        %503 = vmatprep.subr.mxu0 0.0
        %504 = vmatpush1.xpose.msra.mxu0 0.0
        %505 = vmatprep.subr.mxu0 0.0
        %506 = vmatpush1.xpose.msra.mxu0 0.0
        %507 = vmatprep.subr.mxu0 0.0
        %508 = vmatpush1.xpose.msra.mxu0 0.0
        %509 = vmatprep.subr.mxu0 0.0
        %510 = vmatpush1.xpose.msra.mxu0 0.0
        %511 = vmatprep.subr.mxu0 0.0
        %512 = vmatpush1.xpose.msra.mxu0 0.0
        %513 = vmatprep.subr.mxu0 0.0
        %514 = vmatpush1.xpose.msra.mxu0 0.0
        %515 = vmatprep.subr.mxu0 0.0
        %516 = vmatpush1.xpose.msra.mxu0 0.0
        %517 = vmatprep.subr.mxu0 0.0
        %518 = vmatpush1.xpose.msra.mxu0 0.0
        %519 = vmatprep.subr.mxu0 0.0
        %520 = vmatpush1.xpose.msra.mxu0 0.0
        %521 = vmatprep.subr.mxu0 0.0
        %522 = vmatpush1.xpose.msra.mxu0 0.0
        %523 = vmatprep.subr.mxu0 0.0
        %524 = vmatpush1.xpose.msra.mxu0 0.0
        %525 = vmatprep.subr.mxu0 0.0
        %526 = vmatpush1.xpose.msra.mxu0 0.0
        %527 = vmatprep.subr.mxu0 0.0
        %528 = vmatpush1.xpose.msra.mxu0 0.0
        %529 = vmatprep.subr.mxu0 0.0
        %530 = vmatpush1.xpose.msra.mxu0 0.0
        %531 = vmatprep.subr.mxu0 0.0
        %532 = vmatpush1.xpose.msra.mxu0 0.0
        %533 = vmatprep.subr.mxu0 0.0
        %534 = vmatpush1.xpose.msra.mxu0 0.0
        %535 = vmatprep.subr.mxu0 0.0
        %536 = vmatpush1.xpose.msra.mxu0 0.0
        %537 = vmatprep.subr.mxu0 0.0
        %538 = vmatpush1.xpose.msra.mxu0 0.0
        %539 = vmatprep.subr.mxu0 0.0
        %540 = vmatpush1.xpose.msra.mxu0 0.0
        %541 = vmatprep.subr.mxu0 0.0
        %542 = vmatpush1.xpose.msra.mxu0 0.0
        %543 = vmatprep.subr.mxu0 0.0
        %544 = vmatpush1.xpose.msra.mxu0 0.0
        %545 = vmatprep.subr.mxu0 0.0
        %546 = vmatpush1.xpose.msra.mxu0 0.0
        %547 = vmatprep.subr.mxu0 0.0
        %548 = vmatpush1.xpose.msra.mxu0 0.0
        %549 = vmatprep.subr.mxu0 0.0
        %550 = vmatpush1.xpose.msra.mxu0 0.0
        %551 = vmatprep.subr.mxu0 0.0
        %552 = vmatpush1.xpose.msra.mxu0 0.0
        %553 = vmatprep.subr.mxu0 0.0
        %554 = vmatpush1.xpose.msra.mxu0 0.0
        %555 = vmatprep.subr.mxu0 0.0
        %556 = vmatpush1.xpose.msra.mxu0 0.0
        %557 = vmatprep.subr.mxu0 0.0
        %558 = vmatpush1.xpose.msra.mxu0 0.0
        %559 = vmatprep.mubr.f32.mxu0 0.0
        %560 = vmatmul.mubr.f32.gmra.mrb[0].mxu0 %v490
        %v561 = vpop.f32.mrb[0].mxu0
        %v562 = vadd.f32 0.0, %v561
        %v563 = vpop.f32.mrb[0].mxu0
        %564 = vdwg.mxu0
        %vm565 = vcmask 64512
        %v566 = vsel %vm565, %v562, -inf
        %567 = vmax.xlane.f32.xlu0 %v566
        %v568 = vpop.xlane.xlu0 %567
        %v569 = vsub.f32 %v562, %v568
        %v570 = vmul.f32 %v569, 1.442695
        %v571 = vpow.pop %v570
        %v572 = vsel %vm565, %v571, 0.0
        %573 = vadd.xlane.f32.xlu0 %v572
        %v574 = vpop.xlane.xlu0 %573
        %v575 = vrcp.pop %v574
        %v576 = vmul.f32 %v571, %v575
        %v578 = vsel %vm565, %v576, 0
        %580 = vmatprep.subr.mxu0 0.0
        %581 = vmatpush1.msra.mxu0 %v485
        %582 = vmatprep.subr.mxu0 0.0
        %583 = vmatpush1.msra.mxu0 0.0
        %584 = vmatprep.subr.mxu0 0.0
        %585 = vmatpush1.msra.mxu0 0.0
        %586 = vmatprep.subr.mxu0 0.0
        %587 = vmatpush1.msra.mxu0 0.0
        %588 = vmatprep.subr.mxu0 0.0
        %589 = vmatpush1.msra.mxu0 0.0
        %590 = vmatprep.subr.mxu0 0.0
        %591 = vmatpush1.msra.mxu0 0.0
        %592 = vmatprep.subr.mxu0 0.0
        %593 = vmatpush1.msra.mxu0 0.0
        %594 = vmatprep.subr.mxu0 0.0
        %595 = vmatpush1.msra.mxu0 0.0
        %596 = vmatprep.subr.mxu0 0.0
        %597 = vmatpush1.msra.mxu0 0.0
        %598 = vmatprep.subr.mxu0 0.0
        %599 = vmatpush1.msra.mxu0 0.0
        %600 = vmatprep.subr.mxu0 0.0
        %601 = vmatpush1.msra.mxu0 0.0
        %602 = vmatprep.subr.mxu0 0.0
        %603 = vmatpush1.msra.mxu0 0.0
        %604 = vmatprep.subr.mxu0 0.0
        %605 = vmatpush1.msra.mxu0 0.0
        %606 = vmatprep.subr.mxu0 0.0
        %607 = vmatpush1.msra.mxu0 0.0
        %608 = vmatprep.subr.mxu0 0.0
        %609 = vmatpush1.msra.mxu0 0.0
        %610 = vmatprep.subr.mxu0 0.0
        %611 = vmatpush1.msra.mxu0 0.0
        %612 = vmatprep.subr.mxu0 0.0
        %613 = vmatpush1.msra.mxu0 0.0
        %614 = vmatprep.subr.mxu0 0.0
        %615 = vmatpush1.msra.mxu0 0.0
        %616 = vmatprep.subr.mxu0 0.0
        %617 = vmatpush1.msra.mxu0 0.0
        %618 = vmatprep.subr.mxu0 0.0
        %619 = vmatpush1.msra.mxu0 0.0
        %620 = vmatprep.subr.mxu0 0.0
        %621 = vmatpush1.msra.mxu0 0.0
        %622 = vmatprep.subr.mxu0 0.0
        %623 = vmatpush1.msra.mxu0 0.0
        %624 = vmatprep.subr.mxu0 0.0
        %625 = vmatpush1.msra.mxu0 0.0
        %626 = vmatprep.subr.mxu0 0.0
        %627 = vmatpush1.msra.mxu0 0.0
        %628 = vmatprep.subr.mxu0 0.0
        %629 = vmatpush1.msra.mxu0 0.0
        %630 = vmatprep.subr.mxu0 0.0
        %631 = vmatpush1.msra.mxu0 0.0
        %632 = vmatprep.subr.mxu0 0.0
        %633 = vmatpush1.msra.mxu0 0.0
        %634 = vmatprep.subr.mxu0 0.0
        %635 = vmatpush1.msra.mxu0 0.0
        %636 = vmatprep.subr.mxu0 0.0
        %637 = vmatpush1.msra.mxu0 0.0
        %638 = vmatprep.subr.mxu0 0.0
        %639 = vmatpush1.msra.mxu0 0.0
        %640 = vmatprep.subr.mxu0 0.0
        %641 = vmatpush1.msra.mxu0 0.0
        %642 = vmatprep.subr.mxu0 0.0
        %643 = vmatpush1.msra.mxu0 0.0
        %644 = vmatprep.mubr.f32.mxu0 0.0
        %645 = vmatmul.mubr.f32.gmra.mrb[0].mxu0 %v578
        %v646 = vpop.f32.mrb[0].mxu0
        %v647 = vadd.f32 0.0, %v646
        %v648 = vpop.f32.mrb[0].mxu0
        %649 = vdwg.mxu0
        %650 = vrot.lane.b32.xlu0 %v327, 96
        %v651 = vpop.permute.xlu0 %650
        %652 = vrot.lane.b32.xlu0 %v406, 96
        %v653 = vpop.permute.xlu0 %652
        %v654 = vsel %vm256, %v651, 0
        %v656 = vsel %vm256, %v653, 0
        %658 = vmatprep.subr.mxu0 0.0
        %659 = vmatpush1.xpose.msra.mxu0 %v656
        %660 = vmatprep.subr.mxu0 0.0
        %661 = vmatpush1.xpose.msra.mxu0 0.0
        %662 = vmatprep.subr.mxu0 0.0
        %663 = vmatpush1.xpose.msra.mxu0 0.0
        %664 = vmatprep.subr.mxu0 0.0
        %665 = vmatpush1.xpose.msra.mxu0 0.0
        %666 = vmatprep.subr.mxu0 0.0
        %667 = vmatpush1.xpose.msra.mxu0 0.0
        %668 = vmatprep.subr.mxu0 0.0
        %669 = vmatpush1.xpose.msra.mxu0 0.0
        %670 = vmatprep.subr.mxu0 0.0
        %671 = vmatpush1.xpose.msra.mxu0 0.0
        %672 = vmatprep.subr.mxu0 0.0
        %673 = vmatpush1.xpose.msra.mxu0 0.0
        %674 = vmatprep.subr.mxu0 0.0
        %675 = vmatpush1.xpose.msra.mxu0 0.0
        %676 = vmatprep.subr.mxu0 0.0
        %677 = vmatpush1.xpose.msra.mxu0 0.0
        %678 = vmatprep.subr.mxu0 0.0
        %679 = vmatpush1.xpose.msra.mxu0 0.0
        %680 = vmatprep.subr.mxu0 0.0
        %681 = vmatpush1.xpose.msra.mxu0 0.0
        %682 = vmatprep.subr.mxu0 0.0
        %683 = vmatpush1.xpose.msra.mxu0 0.0
        %684 = vmatprep.subr.mxu0 0.0
        %685 = vmatpush1.xpose.msra.mxu0 0.0
        %686 = vmatprep.subr.mxu0 0.0
        %687 = vmatpush1.xpose.msra.mxu0 0.0
        %688 = vmatprep.subr.mxu0 0.0
        %689 = vmatpush1.xpose.msra.mxu0 0.0
        %690 = vmatprep.subr.mxu0 0.0
        %691 = vmatpush1.xpose.msra.mxu0 0.0
        %692 = vmatprep.subr.mxu0 0.0
        %693 = vmatpush1.xpose.msra.mxu0 0.0
        %694 = vmatprep.subr.mxu0 0.0
        %695 = vmatpush1.xpose.msra.mxu0 0.0
        %696 = vmatprep.subr.mxu0 0.0
        %697 = vmatpush1.xpose.msra.mxu0 0.0
        %698 = vmatprep.subr.mxu0 0.0
        %699 = vmatpush1.xpose.msra.mxu0 0.0
        %700 = vmatprep.subr.mxu0 0.0
        %701 = vmatpush1.xpose.msra.mxu0 0.0
        %702 = vmatprep.subr.mxu0 0.0
        %703 = vmatpush1.xpose.msra.mxu0 0.0
        %704 = vmatprep.subr.mxu0 0.0
        %705 = vmatpush1.xpose.msra.mxu0 0.0
        %706 = vmatprep.subr.mxu0 0.0
        %707 = vmatpush1.xpose.msra.mxu0 0.0
        %708 = vmatprep.subr.mxu0 0.0
        %709 = vmatpush1.xpose.msra.mxu0 0.0
        %710 = vmatprep.subr.mxu0 0.0
        %711 = vmatpush1.xpose.msra.mxu0 0.0
        %712 = vmatprep.subr.mxu0 0.0
        %713 = vmatpush1.xpose.msra.mxu0 0.0
        %714 = vmatprep.subr.mxu0 0.0
        %715 = vmatpush1.xpose.msra.mxu0 0.0
        %716 = vmatprep.subr.mxu0 0.0
        %717 = vmatpush1.xpose.msra.mxu0 0.0
        %718 = vmatprep.subr.mxu0 0.0
        %719 = vmatpush1.xpose.msra.mxu0 0.0
        %720 = vmatprep.subr.mxu0 0.0
        %721 = vmatpush1.xpose.msra.mxu0 0.0
        %722 = vmatprep.mubr.f32.mxu0 0.0
        %723 = vmatmul.mubr.f32.gmra.mrb[0].mxu0 %v654
        %v724 = vpop.f32.mrb[0].mxu0
        %v725 = vadd.f32 0.0, %v724
        %v726 = vpop.f32.mrb[0].mxu0
        %727 = vdwg.mxu0
        %v728 = vsel %vm565, %v725, -inf
        %729 = vmax.xlane.f32.xlu0 %v728
        %v730 = vpop.xlane.xlu0 %729
        %v731 = vsub.f32 %v725, %v730
        %v732 = vmul.f32 %v731, 1.442695
        %v733 = vpow.pop %v732
        %v734 = vsel %vm565, %v733, 0.0
        %735 = vadd.xlane.f32.xlu0 %v734
        %v736 = vpop.xlane.xlu0 %735
        %v737 = vrcp.pop %v736
        %v738 = vmul.f32 %v733, %v737
        %740 = vrot.lane.b32.xlu0 %v485, 96
        %v741 = vpop.permute.xlu0 %740
        %v744 = vsel %vm565, %v738, 0
        %746 = vmatprep.subr.mxu0 0.0
        %747 = vmatpush1.msra.mxu0 %v741
        %748 = vmatprep.subr.mxu0 0.0
        %749 = vmatpush1.msra.mxu0 0.0
        %750 = vmatprep.subr.mxu0 0.0
        %751 = vmatpush1.msra.mxu0 0.0
        %752 = vmatprep.subr.mxu0 0.0
        %753 = vmatpush1.msra.mxu0 0.0
        %754 = vmatprep.subr.mxu0 0.0
        %755 = vmatpush1.msra.mxu0 0.0
        %756 = vmatprep.subr.mxu0 0.0
        %757 = vmatpush1.msra.mxu0 0.0
        %758 = vmatprep.subr.mxu0 0.0
        %759 = vmatpush1.msra.mxu0 0.0
        %760 = vmatprep.subr.mxu0 0.0
        %761 = vmatpush1.msra.mxu0 0.0
        %762 = vmatprep.subr.mxu0 0.0
        %763 = vmatpush1.msra.mxu0 0.0
        %764 = vmatprep.subr.mxu0 0.0
        %765 = vmatpush1.msra.mxu0 0.0
        %766 = vmatprep.subr.mxu0 0.0
        %767 = vmatpush1.msra.mxu0 0.0
        %768 = vmatprep.subr.mxu0 0.0
        %769 = vmatpush1.msra.mxu0 0.0
        %770 = vmatprep.subr.mxu0 0.0
        %771 = vmatpush1.msra.mxu0 0.0
        %772 = vmatprep.subr.mxu0 0.0
        %773 = vmatpush1.msra.mxu0 0.0
        %774 = vmatprep.subr.mxu0 0.0
        %775 = vmatpush1.msra.mxu0 0.0
        %776 = vmatprep.subr.mxu0 0.0
        %777 = vmatpush1.msra.mxu0 0.0
        %778 = vmatprep.subr.mxu0 0.0
        %779 = vmatpush1.msra.mxu0 0.0
        %780 = vmatprep.subr.mxu0 0.0
        %781 = vmatpush1.msra.mxu0 0.0
        %782 = vmatprep.subr.mxu0 0.0
        %783 = vmatpush1.msra.mxu0 0.0
        %784 = vmatprep.subr.mxu0 0.0
        %785 = vmatpush1.msra.mxu0 0.0
        %786 = vmatprep.subr.mxu0 0.0
        %787 = vmatpush1.msra.mxu0 0.0
        %788 = vmatprep.subr.mxu0 0.0
        %789 = vmatpush1.msra.mxu0 0.0
        %790 = vmatprep.subr.mxu0 0.0
        %791 = vmatpush1.msra.mxu0 0.0
        %792 = vmatprep.subr.mxu0 0.0
        %793 = vmatpush1.msra.mxu0 0.0
        %794 = vmatprep.subr.mxu0 0.0
        %795 = vmatpush1.msra.mxu0 0.0
        %796 = vmatprep.subr.mxu0 0.0
        %797 = vmatpush1.msra.mxu0 0.0
        %798 = vmatprep.subr.mxu0 0.0
        %799 = vmatpush1.msra.mxu0 0.0
        %800 = vmatprep.subr.mxu0 0.0
        %801 = vmatpush1.msra.mxu0 0.0
        %802 = vmatprep.subr.mxu0 0.0
        %803 = vmatpush1.msra.mxu0 0.0
        %804 = vmatprep.subr.mxu0 0.0
        %805 = vmatpush1.msra.mxu0 0.0
        %806 = vmatprep.subr.mxu0 0.0
        %807 = vmatpush1.msra.mxu0 0.0
        %808 = vmatprep.subr.mxu0 0.0
        %809 = vmatpush1.msra.mxu0 0.0
        %810 = vmatprep.mubr.f32.mxu0 0.0
        %811 = vmatmul.mubr.f32.gmra.mrb[0].mxu0 %v744
        %v812 = vpop.f32.mrb[0].mxu0
        %v813 = vadd.f32 0.0, %v812
        %v814 = vpop.f32.mrb[0].mxu0
        %815 = vdwg.mxu0
        %816 = vrot.lane.b32.xlu0 %v327, 64
        %v817 = vpop.permute.xlu0 %816
        %818 = vrot.lane.b32.xlu0 %v406, 64
        %v819 = vpop.permute.xlu0 %818
        %v820 = vsel %vm256, %v817, 0
        %v822 = vsel %vm256, %v819, 0
        %824 = vmatprep.subr.mxu0 0.0
        %825 = vmatpush1.xpose.msra.mxu0 %v822
        %826 = vmatprep.subr.mxu0 0.0
        %827 = vmatpush1.xpose.msra.mxu0 0.0
        %828 = vmatprep.subr.mxu0 0.0
        %829 = vmatpush1.xpose.msra.mxu0 0.0
        %830 = vmatprep.subr.mxu0 0.0
        %831 = vmatpush1.xpose.msra.mxu0 0.0
        %832 = vmatprep.subr.mxu0 0.0
        %833 = vmatpush1.xpose.msra.mxu0 0.0
        %834 = vmatprep.subr.mxu0 0.0
        %835 = vmatpush1.xpose.msra.mxu0 0.0
        %836 = vmatprep.subr.mxu0 0.0
        %837 = vmatpush1.xpose.msra.mxu0 0.0
        %838 = vmatprep.subr.mxu0 0.0
        %839 = vmatpush1.xpose.msra.mxu0 0.0
        %840 = vmatprep.subr.mxu0 0.0
        %841 = vmatpush1.xpose.msra.mxu0 0.0
        %842 = vmatprep.subr.mxu0 0.0
        %843 = vmatpush1.xpose.msra.mxu0 0.0
        %844 = vmatprep.subr.mxu0 0.0
        %845 = vmatpush1.xpose.msra.mxu0 0.0
        %846 = vmatprep.subr.mxu0 0.0
        %847 = vmatpush1.xpose.msra.mxu0 0.0
        %848 = vmatprep.subr.mxu0 0.0
        %849 = vmatpush1.xpose.msra.mxu0 0.0
        %850 = vmatprep.subr.mxu0 0.0
        %851 = vmatpush1.xpose.msra.mxu0 0.0
        %852 = vmatprep.subr.mxu0 0.0
        %853 = vmatpush1.xpose.msra.mxu0 0.0
        %854 = vmatprep.subr.mxu0 0.0
        %855 = vmatpush1.xpose.msra.mxu0 0.0
        %856 = vmatprep.subr.mxu0 0.0
        %857 = vmatpush1.xpose.msra.mxu0 0.0
        %858 = vmatprep.subr.mxu0 0.0
        %859 = vmatpush1.xpose.msra.mxu0 0.0
        %860 = vmatprep.subr.mxu0 0.0
        %861 = vmatpush1.xpose.msra.mxu0 0.0
        %862 = vmatprep.subr.mxu0 0.0
        %863 = vmatpush1.xpose.msra.mxu0 0.0
        %864 = vmatprep.subr.mxu0 0.0
        %865 = vmatpush1.xpose.msra.mxu0 0.0
        %866 = vmatprep.subr.mxu0 0.0
        %867 = vmatpush1.xpose.msra.mxu0 0.0
        %868 = vmatprep.subr.mxu0 0.0
        %869 = vmatpush1.xpose.msra.mxu0 0.0
        %870 = vmatprep.subr.mxu0 0.0
        %871 = vmatpush1.xpose.msra.mxu0 0.0
        %872 = vmatprep.subr.mxu0 0.0
        %873 = vmatpush1.xpose.msra.mxu0 0.0
        %874 = vmatprep.subr.mxu0 0.0
        %875 = vmatpush1.xpose.msra.mxu0 0.0
        %876 = vmatprep.subr.mxu0 0.0
        %877 = vmatpush1.xpose.msra.mxu0 0.0
        %878 = vmatprep.subr.mxu0 0.0
        %879 = vmatpush1.xpose.msra.mxu0 0.0
        %880 = vmatprep.subr.mxu0 0.0
        %881 = vmatpush1.xpose.msra.mxu0 0.0
        %882 = vmatprep.subr.mxu0 0.0
        %883 = vmatpush1.xpose.msra.mxu0 0.0
        %884 = vmatprep.subr.mxu0 0.0
        %885 = vmatpush1.xpose.msra.mxu0 0.0
        %886 = vmatprep.subr.mxu0 0.0
        %887 = vmatpush1.xpose.msra.mxu0 0.0
        %888 = vmatprep.mubr.f32.mxu0 0.0
        %889 = vmatmul.mubr.f32.gmra.mrb[0].mxu0 %v820
        %v890 = vpop.f32.mrb[0].mxu0
        %v891 = vadd.f32 0.0, %v890
        %v892 = vpop.f32.mrb[0].mxu0
        %893 = vdwg.mxu0
        %v894 = vsel %vm565, %v891, -inf
        %895 = vmax.xlane.f32.xlu0 %v894
        %v896 = vpop.xlane.xlu0 %895
        %v897 = vsub.f32 %v891, %v896
        %v898 = vmul.f32 %v897, 1.442695
        %v899 = vpow.pop %v898
        %v900 = vsel %vm565, %v899, 0.0
        %901 = vadd.xlane.f32.xlu0 %v900
        %v902 = vpop.xlane.xlu0 %901
        %v903 = vrcp.pop %v902
        %v904 = vmul.f32 %v899, %v903
        %905 = vrot.lane.b32.xlu0 %v485, 64
        %v906 = vpop.permute.xlu0 %905
        %v909 = vsel %vm565, %v904, 0
        %911 = vmatprep.subr.mxu0 0.0
        %912 = vmatpush1.msra.mxu0 %v906
        %913 = vmatprep.subr.mxu0 0.0
        %914 = vmatpush1.msra.mxu0 0.0
        %915 = vmatprep.subr.mxu0 0.0
        %916 = vmatpush1.msra.mxu0 0.0
        %917 = vmatprep.subr.mxu0 0.0
        %918 = vmatpush1.msra.mxu0 0.0
        %919 = vmatprep.subr.mxu0 0.0
        %920 = vmatpush1.msra.mxu0 0.0
        %921 = vmatprep.subr.mxu0 0.0
        %922 = vmatpush1.msra.mxu0 0.0
        %923 = vmatprep.subr.mxu0 0.0
        %924 = vmatpush1.msra.mxu0 0.0
        %925 = vmatprep.subr.mxu0 0.0
        %926 = vmatpush1.msra.mxu0 0.0
        %927 = vmatprep.subr.mxu0 0.0
        %928 = vmatpush1.msra.mxu0 0.0
        %929 = vmatprep.subr.mxu0 0.0
        %930 = vmatpush1.msra.mxu0 0.0
        %931 = vmatprep.subr.mxu0 0.0
        %932 = vmatpush1.msra.mxu0 0.0
        %933 = vmatprep.subr.mxu0 0.0
        %934 = vmatpush1.msra.mxu0 0.0
        %935 = vmatprep.subr.mxu0 0.0
        %936 = vmatpush1.msra.mxu0 0.0
        %937 = vmatprep.subr.mxu0 0.0
        %938 = vmatpush1.msra.mxu0 0.0
        %939 = vmatprep.subr.mxu0 0.0
        %940 = vmatpush1.msra.mxu0 0.0
        %941 = vmatprep.subr.mxu0 0.0
        %942 = vmatpush1.msra.mxu0 0.0
        %943 = vmatprep.subr.mxu0 0.0
        %944 = vmatpush1.msra.mxu0 0.0
        %945 = vmatprep.subr.mxu0 0.0
        %946 = vmatpush1.msra.mxu0 0.0
        %947 = vmatprep.subr.mxu0 0.0
        %948 = vmatpush1.msra.mxu0 0.0
        %949 = vmatprep.subr.mxu0 0.0
        %950 = vmatpush1.msra.mxu0 0.0
        %951 = vmatprep.subr.mxu0 0.0
        %952 = vmatpush1.msra.mxu0 0.0
        %953 = vmatprep.subr.mxu0 0.0
        %954 = vmatpush1.msra.mxu0 0.0
        %955 = vmatprep.subr.mxu0 0.0
        %956 = vmatpush1.msra.mxu0 0.0
        %957 = vmatprep.subr.mxu0 0.0
        %958 = vmatpush1.msra.mxu0 0.0
        %959 = vmatprep.subr.mxu0 0.0
        %960 = vmatpush1.msra.mxu0 0.0
        %961 = vmatprep.subr.mxu0 0.0
        %962 = vmatpush1.msra.mxu0 0.0
        %963 = vmatprep.subr.mxu0 0.0
        %964 = vmatpush1.msra.mxu0 0.0
        %965 = vmatprep.subr.mxu0 0.0
        %966 = vmatpush1.msra.mxu0 0.0
        %967 = vmatprep.subr.mxu0 0.0
        %968 = vmatpush1.msra.mxu0 0.0
        %969 = vmatprep.subr.mxu0 0.0
        %970 = vmatpush1.msra.mxu0 0.0
        %971 = vmatprep.subr.mxu0 0.0
        %972 = vmatpush1.msra.mxu0 0.0
        %973 = vmatprep.subr.mxu0 0.0
        %974 = vmatpush1.msra.mxu0 0.0
        %975 = vmatprep.mubr.f32.mxu0 0.0
        %976 = vmatmul.mubr.f32.gmra.mrb[0].mxu0 %v909
        %v977 = vpop.f32.mrb[0].mxu0
        %v978 = vadd.f32 0.0, %v977
        %v979 = vpop.f32.mrb[0].mxu0
        %980 = vdwg.mxu0
        %981 = vrot.lane.b32.xlu0 %v327, 32
        %v982 = vpop.permute.xlu0 %981
        %983 = vrot.lane.b32.xlu0 %v406, 32
        %v984 = vpop.permute.xlu0 %983
        %v985 = vsel %vm256, %v982, 0
        %v987 = vsel %vm256, %v984, 0
        %989 = vmatprep.subr.mxu0 0.0
        %990 = vmatpush1.xpose.msra.mxu0 %v987
        %991 = vmatprep.subr.mxu0 0.0
        %992 = vmatpush1.xpose.msra.mxu0 0.0
        %993 = vmatprep.subr.mxu0 0.0
        %994 = vmatpush1.xpose.msra.mxu0 0.0
        %995 = vmatprep.subr.mxu0 0.0
        %996 = vmatpush1.xpose.msra.mxu0 0.0
        %997 = vmatprep.subr.mxu0 0.0
        %998 = vmatpush1.xpose.msra.mxu0 0.0
        %999 = vmatprep.subr.mxu0 0.0
        %1000 = vmatpush1.xpose.msra.mxu0 0.0
        %1001 = vmatprep.subr.mxu0 0.0
        %1002 = vmatpush1.xpose.msra.mxu0 0.0
        %1003 = vmatprep.subr.mxu0 0.0
        %1004 = vmatpush1.xpose.msra.mxu0 0.0
        %1005 = vmatprep.subr.mxu0 0.0
        %1006 = vmatpush1.xpose.msra.mxu0 0.0
        %1007 = vmatprep.subr.mxu0 0.0
        %1008 = vmatpush1.xpose.msra.mxu0 0.0
        %1009 = vmatprep.subr.mxu0 0.0
        %1010 = vmatpush1.xpose.msra.mxu0 0.0
        %1011 = vmatprep.subr.mxu0 0.0
        %1012 = vmatpush1.xpose.msra.mxu0 0.0
        %1013 = vmatprep.subr.mxu0 0.0
        %1014 = vmatpush1.xpose.msra.mxu0 0.0
        %1015 = vmatprep.subr.mxu0 0.0
        %1016 = vmatpush1.xpose.msra.mxu0 0.0
        %1017 = vmatprep.subr.mxu0 0.0
        %1018 = vmatpush1.xpose.msra.mxu0 0.0
        %1019 = vmatprep.subr.mxu0 0.0
        %1020 = vmatpush1.xpose.msra.mxu0 0.0
        %1021 = vmatprep.subr.mxu0 0.0
        %1022 = vmatpush1.xpose.msra.mxu0 0.0
        %1023 = vmatprep.subr.mxu0 0.0
        %1024 = vmatpush1.xpose.msra.mxu0 0.0
        %1025 = vmatprep.subr.mxu0 0.0
        %1026 = vmatpush1.xpose.msra.mxu0 0.0
        %1027 = vmatprep.subr.mxu0 0.0
        %1028 = vmatpush1.xpose.msra.mxu0 0.0
        %1029 = vmatprep.subr.mxu0 0.0
        %1030 = vmatpush1.xpose.msra.mxu0 0.0
        %1031 = vmatprep.subr.mxu0 0.0
        %1032 = vmatpush1.xpose.msra.mxu0 0.0
        %1033 = vmatprep.subr.mxu0 0.0
        %1034 = vmatpush1.xpose.msra.mxu0 0.0
        %1035 = vmatprep.subr.mxu0 0.0
        %1036 = vmatpush1.xpose.msra.mxu0 0.0
        %1037 = vmatprep.subr.mxu0 0.0
        %1038 = vmatpush1.xpose.msra.mxu0 0.0
        %1039 = vmatprep.subr.mxu0 0.0
        %1040 = vmatpush1.xpose.msra.mxu0 0.0
        %1041 = vmatprep.subr.mxu0 0.0
        %1042 = vmatpush1.xpose.msra.mxu0 0.0
        %1043 = vmatprep.subr.mxu0 0.0
        %1044 = vmatpush1.xpose.msra.mxu0 0.0
        %1045 = vmatprep.subr.mxu0 0.0
        %1046 = vmatpush1.xpose.msra.mxu0 0.0
        %1047 = vmatprep.subr.mxu0 0.0
        %1048 = vmatpush1.xpose.msra.mxu0 0.0
        %1049 = vmatprep.subr.mxu0 0.0
        %1050 = vmatpush1.xpose.msra.mxu0 0.0
        %1051 = vmatprep.subr.mxu0 0.0
        %1052 = vmatpush1.xpose.msra.mxu0 0.0
        %1053 = vmatprep.mubr.f32.mxu0 0.0
        %1054 = vmatmul.mubr.f32.gmra.mrb[0].mxu0 %v985
        %v1055 = vpop.f32.mrb[0].mxu0
        %v1056 = vadd.f32 0.0, %v1055
        %v1057 = vpop.f32.mrb[0].mxu0
        %1058 = vdwg.mxu0
        %v1059 = vsel %vm565, %v1056, -inf
        %1060 = vmax.xlane.f32.xlu0 %v1059
        %v1061 = vpop.xlane.xlu0 %1060
        %v1062 = vsub.f32 %v1056, %v1061
        %v1063 = vmul.f32 %v1062, 1.442695
        %v1064 = vpow.pop %v1063
        %v1065 = vsel %vm565, %v1064, 0.0
        %1066 = vadd.xlane.f32.xlu0 %v1065
        %v1067 = vpop.xlane.xlu0 %1066
        %v1068 = vrcp.pop %v1067
        %v1069 = vmul.f32 %v1064, %v1068
        %1070 = vrot.lane.b32.xlu0 %v485, 32
        %v1071 = vpop.permute.xlu0 %1070
        %v1074 = vsel %vm565, %v1069, 0
        %1076 = vmatprep.subr.mxu0 0.0
        %1077 = vmatpush1.msra.mxu0 %v1071
        %1078 = vmatprep.subr.mxu0 0.0
        %1079 = vmatpush1.msra.mxu0 0.0
        %1080 = vmatprep.subr.mxu0 0.0
        %1081 = vmatpush1.msra.mxu0 0.0
        %1082 = vmatprep.subr.mxu0 0.0
        %1083 = vmatpush1.msra.mxu0 0.0
        %1084 = vmatprep.subr.mxu0 0.0
        %1085 = vmatpush1.msra.mxu0 0.0
        %1086 = vmatprep.subr.mxu0 0.0
        %1087 = vmatpush1.msra.mxu0 0.0
        %1088 = vmatprep.subr.mxu0 0.0
        %1089 = vmatpush1.msra.mxu0 0.0
        %1090 = vmatprep.subr.mxu0 0.0
        %1091 = vmatpush1.msra.mxu0 0.0
        %1092 = vmatprep.subr.mxu0 0.0
        %1093 = vmatpush1.msra.mxu0 0.0
        %1094 = vmatprep.subr.mxu0 0.0
        %1095 = vmatpush1.msra.mxu0 0.0
        %1096 = vmatprep.subr.mxu0 0.0
        %1097 = vmatpush1.msra.mxu0 0.0
        %1098 = vmatprep.subr.mxu0 0.0
        %1099 = vmatpush1.msra.mxu0 0.0
        %1100 = vmatprep.subr.mxu0 0.0
        %1101 = vmatpush1.msra.mxu0 0.0
        %1102 = vmatprep.subr.mxu0 0.0
        %1103 = vmatpush1.msra.mxu0 0.0
        %1104 = vmatprep.subr.mxu0 0.0
        %1105 = vmatpush1.msra.mxu0 0.0
        %1106 = vmatprep.subr.mxu0 0.0
        %1107 = vmatpush1.msra.mxu0 0.0
        %1108 = vmatprep.subr.mxu0 0.0
        %1109 = vmatpush1.msra.mxu0 0.0
        %1110 = vmatprep.subr.mxu0 0.0
        %1111 = vmatpush1.msra.mxu0 0.0
        %1112 = vmatprep.subr.mxu0 0.0
        %1113 = vmatpush1.msra.mxu0 0.0
        %1114 = vmatprep.subr.mxu0 0.0
        %1115 = vmatpush1.msra.mxu0 0.0
        %1116 = vmatprep.subr.mxu0 0.0
        %1117 = vmatpush1.msra.mxu0 0.0
        %1118 = vmatprep.subr.mxu0 0.0
        %1119 = vmatpush1.msra.mxu0 0.0
        %1120 = vmatprep.subr.mxu0 0.0
        %1121 = vmatpush1.msra.mxu0 0.0
        %1122 = vmatprep.subr.mxu0 0.0
        %1123 = vmatpush1.msra.mxu0 0.0
        %1124 = vmatprep.subr.mxu0 0.0
        %1125 = vmatpush1.msra.mxu0 0.0
        %1126 = vmatprep.subr.mxu0 0.0
        %1127 = vmatpush1.msra.mxu0 0.0
        %1128 = vmatprep.subr.mxu0 0.0
        %1129 = vmatpush1.msra.mxu0 0.0
        %1130 = vmatprep.subr.mxu0 0.0
        %1131 = vmatpush1.msra.mxu0 0.0
        %1132 = vmatprep.subr.mxu0 0.0
        %1133 = vmatpush1.msra.mxu0 0.0
        %1134 = vmatprep.subr.mxu0 0.0
        %1135 = vmatpush1.msra.mxu0 0.0
        %1136 = vmatprep.subr.mxu0 0.0
        %1137 = vmatpush1.msra.mxu0 0.0
        %1138 = vmatprep.subr.mxu0 0.0
        %1139 = vmatpush1.msra.mxu0 0.0
        %1140 = vmatprep.mubr.f32.mxu0 0.0
        %1141 = vmatmul.mubr.f32.gmra.mrb[0].mxu0 %v1074
        %v1142 = vpop.f32.mrb[0].mxu0
        %v1143 = vadd.f32 0.0, %v1142
        %v1144 = vpop.f32.mrb[0].mxu0
        %1145 = vdwg.mxu0
        %v1147 = vsel %vm256, %v329, 0
        %v1150 = vsel %vm256, %v408, 0
        %1152 = vmatprep.subr.mxu0 0.0
        %1153 = vmatpush1.xpose.msra.mxu0 %v1150
        %1154 = vmatprep.subr.mxu0 0.0
        %1155 = vmatpush1.xpose.msra.mxu0 0.0
        %1156 = vmatprep.subr.mxu0 0.0
        %1157 = vmatpush1.xpose.msra.mxu0 0.0
        %1158 = vmatprep.subr.mxu0 0.0
        %1159 = vmatpush1.xpose.msra.mxu0 0.0
        %1160 = vmatprep.subr.mxu0 0.0
        %1161 = vmatpush1.xpose.msra.mxu0 0.0
        %1162 = vmatprep.subr.mxu0 0.0
        %1163 = vmatpush1.xpose.msra.mxu0 0.0
        %1164 = vmatprep.subr.mxu0 0.0
        %1165 = vmatpush1.xpose.msra.mxu0 0.0
        %1166 = vmatprep.subr.mxu0 0.0
        %1167 = vmatpush1.xpose.msra.mxu0 0.0
        %1168 = vmatprep.subr.mxu0 0.0
        %1169 = vmatpush1.xpose.msra.mxu0 0.0
        %1170 = vmatprep.subr.mxu0 0.0
        %1171 = vmatpush1.xpose.msra.mxu0 0.0
        %1172 = vmatprep.subr.mxu0 0.0
        %1173 = vmatpush1.xpose.msra.mxu0 0.0
        %1174 = vmatprep.subr.mxu0 0.0
        %1175 = vmatpush1.xpose.msra.mxu0 0.0
        %1176 = vmatprep.subr.mxu0 0.0
        %1177 = vmatpush1.xpose.msra.mxu0 0.0
        %1178 = vmatprep.subr.mxu0 0.0
        %1179 = vmatpush1.xpose.msra.mxu0 0.0
        %1180 = vmatprep.subr.mxu0 0.0
        %1181 = vmatpush1.xpose.msra.mxu0 0.0
        %1182 = vmatprep.subr.mxu0 0.0
        %1183 = vmatpush1.xpose.msra.mxu0 0.0
        %1184 = vmatprep.subr.mxu0 0.0
        %1185 = vmatpush1.xpose.msra.mxu0 0.0
        %1186 = vmatprep.subr.mxu0 0.0
        %1187 = vmatpush1.xpose.msra.mxu0 0.0
        %1188 = vmatprep.subr.mxu0 0.0
        %1189 = vmatpush1.xpose.msra.mxu0 0.0
        %1190 = vmatprep.subr.mxu0 0.0
        %1191 = vmatpush1.xpose.msra.mxu0 0.0
        %1192 = vmatprep.subr.mxu0 0.0
        %1193 = vmatpush1.xpose.msra.mxu0 0.0
        %1194 = vmatprep.subr.mxu0 0.0
        %1195 = vmatpush1.xpose.msra.mxu0 0.0
        %1196 = vmatprep.subr.mxu0 0.0
        %1197 = vmatpush1.xpose.msra.mxu0 0.0
        %1198 = vmatprep.subr.mxu0 0.0
        %1199 = vmatpush1.xpose.msra.mxu0 0.0
        %1200 = vmatprep.subr.mxu0 0.0
        %1201 = vmatpush1.xpose.msra.mxu0 0.0
        %1202 = vmatprep.subr.mxu0 0.0
        %1203 = vmatpush1.xpose.msra.mxu0 0.0
        %1204 = vmatprep.subr.mxu0 0.0
        %1205 = vmatpush1.xpose.msra.mxu0 0.0
        %1206 = vmatprep.subr.mxu0 0.0
        %1207 = vmatpush1.xpose.msra.mxu0 0.0
        %1208 = vmatprep.subr.mxu0 0.0
        %1209 = vmatpush1.xpose.msra.mxu0 0.0
        %1210 = vmatprep.subr.mxu0 0.0
        %1211 = vmatpush1.xpose.msra.mxu0 0.0
        %1212 = vmatprep.subr.mxu0 0.0
        %1213 = vmatpush1.xpose.msra.mxu0 0.0
        %1214 = vmatprep.subr.mxu0 0.0
        %1215 = vmatpush1.xpose.msra.mxu0 0.0
        %1216 = vmatprep.mubr.f32.mxu0 0.0
        %1217 = vmatmul.mubr.f32.gmra.mrb[0].mxu0 %v1147
        %v1218 = vpop.f32.mrb[0].mxu0
        %v1219 = vadd.f32 0.0, %v1218
        %v1220 = vpop.f32.mrb[0].mxu0
        %1221 = vdwg.mxu0
        %v1222 = vsel %vm565, %v1219, -inf
        %1223 = vmax.xlane.f32.xlu0 %v1222
        %v1224 = vpop.xlane.xlu0 %1223
        %v1225 = vsub.f32 %v1219, %v1224
        %v1226 = vmul.f32 %v1225, 1.442695
        %v1227 = vpow.pop %v1226
        %v1228 = vsel %vm565, %v1227, 0.0
        %1229 = vadd.xlane.f32.xlu0 %v1228
        %v1230 = vpop.xlane.xlu0 %1229
        %v1231 = vrcp.pop %v1230
        %v1232 = vmul.f32 %v1227, %v1231
        %v1234 = vsel %vm565, %v1232, 0
        %1236 = vmatprep.subr.mxu0 0.0
        %1237 = vmatpush1.msra.mxu0 %v487
        %1238 = vmatprep.subr.mxu0 0.0
        %1239 = vmatpush1.msra.mxu0 0.0
        %1240 = vmatprep.subr.mxu0 0.0
        %1241 = vmatpush1.msra.mxu0 0.0
        %1242 = vmatprep.subr.mxu0 0.0
        %1243 = vmatpush1.msra.mxu0 0.0
        %1244 = vmatprep.subr.mxu0 0.0
        %1245 = vmatpush1.msra.mxu0 0.0
        %1246 = vmatprep.subr.mxu0 0.0
        %1247 = vmatpush1.msra.mxu0 0.0
        %1248 = vmatprep.subr.mxu0 0.0
        %1249 = vmatpush1.msra.mxu0 0.0
        %1250 = vmatprep.subr.mxu0 0.0
        %1251 = vmatpush1.msra.mxu0 0.0
        %1252 = vmatprep.subr.mxu0 0.0
        %1253 = vmatpush1.msra.mxu0 0.0
        %1254 = vmatprep.subr.mxu0 0.0
        %1255 = vmatpush1.msra.mxu0 0.0
        %1256 = vmatprep.subr.mxu0 0.0
        %1257 = vmatpush1.msra.mxu0 0.0
        %1258 = vmatprep.subr.mxu0 0.0
        %1259 = vmatpush1.msra.mxu0 0.0
        %1260 = vmatprep.subr.mxu0 0.0
        %1261 = vmatpush1.msra.mxu0 0.0
        %1262 = vmatprep.subr.mxu0 0.0
        %1263 = vmatpush1.msra.mxu0 0.0
        %1264 = vmatprep.subr.mxu0 0.0
        %1265 = vmatpush1.msra.mxu0 0.0
        %1266 = vmatprep.subr.mxu0 0.0
        %1267 = vmatpush1.msra.mxu0 0.0
        %1268 = vmatprep.subr.mxu0 0.0
        %1269 = vmatpush1.msra.mxu0 0.0
        %1270 = vmatprep.subr.mxu0 0.0
        %1271 = vmatpush1.msra.mxu0 0.0
        %1272 = vmatprep.subr.mxu0 0.0
        %1273 = vmatpush1.msra.mxu0 0.0
        %1274 = vmatprep.subr.mxu0 0.0
        %1275 = vmatpush1.msra.mxu0 0.0
        %1276 = vmatprep.subr.mxu0 0.0
        %1277 = vmatpush1.msra.mxu0 0.0
        %1278 = vmatprep.subr.mxu0 0.0
        %1279 = vmatpush1.msra.mxu0 0.0
        %1280 = vmatprep.subr.mxu0 0.0
        %1281 = vmatpush1.msra.mxu0 0.0
        %1282 = vmatprep.subr.mxu0 0.0
        %1283 = vmatpush1.msra.mxu0 0.0
        %1284 = vmatprep.subr.mxu0 0.0
        %1285 = vmatpush1.msra.mxu0 0.0
        %1286 = vmatprep.subr.mxu0 0.0
        %1287 = vmatpush1.msra.mxu0 0.0
        %1288 = vmatprep.subr.mxu0 0.0
        %1289 = vmatpush1.msra.mxu0 0.0
        %1290 = vmatprep.subr.mxu0 0.0
        %1291 = vmatpush1.msra.mxu0 0.0
        %1292 = vmatprep.subr.mxu0 0.0
        %1293 = vmatpush1.msra.mxu0 0.0
        %1294 = vmatprep.subr.mxu0 0.0
        %1295 = vmatpush1.msra.mxu0 0.0
        %1296 = vmatprep.subr.mxu0 0.0
        %1297 = vmatpush1.msra.mxu0 0.0
        %1298 = vmatprep.subr.mxu0 0.0
        %1299 = vmatpush1.msra.mxu0 0.0
        %1300 = vmatprep.mubr.f32.mxu0 0.0
        %1301 = vmatmul.mubr.f32.gmra.mrb[0].mxu0 %v1234
        %v1302 = vpop.f32.mrb[0].mxu0
        %v1303 = vadd.f32 0.0, %v1302
        %v1304 = vpop.f32.mrb[0].mxu0
        %1305 = vdwg.mxu0
        %1306 = vrot.lane.b32.xlu0 %v329, 96
        %v1307 = vpop.permute.xlu0 %1306
        %1308 = vrot.lane.b32.xlu0 %v408, 96
        %v1309 = vpop.permute.xlu0 %1308
        %v1310 = vsel %vm256, %v1307, 0
        %v1312 = vsel %vm256, %v1309, 0
        %1314 = vmatprep.subr.mxu0 0.0
        %1315 = vmatpush1.xpose.msra.mxu0 %v1312
        %1316 = vmatprep.subr.mxu0 0.0
        %1317 = vmatpush1.xpose.msra.mxu0 0.0
        %1318 = vmatprep.subr.mxu0 0.0
        %1319 = vmatpush1.xpose.msra.mxu0 0.0
        %1320 = vmatprep.subr.mxu0 0.0
        %1321 = vmatpush1.xpose.msra.mxu0 0.0
        %1322 = vmatprep.subr.mxu0 0.0
        %1323 = vmatpush1.xpose.msra.mxu0 0.0
        %1324 = vmatprep.subr.mxu0 0.0
        %1325 = vmatpush1.xpose.msra.mxu0 0.0
        %1326 = vmatprep.subr.mxu0 0.0
        %1327 = vmatpush1.xpose.msra.mxu0 0.0
        %1328 = vmatprep.subr.mxu0 0.0
        %1329 = vmatpush1.xpose.msra.mxu0 0.0
        %1330 = vmatprep.subr.mxu0 0.0
        %1331 = vmatpush1.xpose.msra.mxu0 0.0
        %1332 = vmatprep.subr.mxu0 0.0
        %1333 = vmatpush1.xpose.msra.mxu0 0.0
        %1334 = vmatprep.subr.mxu0 0.0
        %1335 = vmatpush1.xpose.msra.mxu0 0.0
        %1336 = vmatprep.subr.mxu0 0.0
        %1337 = vmatpush1.xpose.msra.mxu0 0.0
        %1338 = vmatprep.subr.mxu0 0.0
        %1339 = vmatpush1.xpose.msra.mxu0 0.0
        %1340 = vmatprep.subr.mxu0 0.0
        %1341 = vmatpush1.xpose.msra.mxu0 0.0
        %1342 = vmatprep.subr.mxu0 0.0
        %1343 = vmatpush1.xpose.msra.mxu0 0.0
        %1344 = vmatprep.subr.mxu0 0.0
        %1345 = vmatpush1.xpose.msra.mxu0 0.0
        %1346 = vmatprep.subr.mxu0 0.0
        %1347 = vmatpush1.xpose.msra.mxu0 0.0
        %1348 = vmatprep.subr.mxu0 0.0
        %1349 = vmatpush1.xpose.msra.mxu0 0.0
        %1350 = vmatprep.subr.mxu0 0.0
        %1351 = vmatpush1.xpose.msra.mxu0 0.0
        %1352 = vmatprep.subr.mxu0 0.0
        %1353 = vmatpush1.xpose.msra.mxu0 0.0
        %1354 = vmatprep.subr.mxu0 0.0
        %1355 = vmatpush1.xpose.msra.mxu0 0.0
        %1356 = vmatprep.subr.mxu0 0.0
        %1357 = vmatpush1.xpose.msra.mxu0 0.0
        %1358 = vmatprep.subr.mxu0 0.0
        %1359 = vmatpush1.xpose.msra.mxu0 0.0
        %1360 = vmatprep.subr.mxu0 0.0
        %1361 = vmatpush1.xpose.msra.mxu0 0.0
        %1362 = vmatprep.subr.mxu0 0.0
        %1363 = vmatpush1.xpose.msra.mxu0 0.0
        %1364 = vmatprep.subr.mxu0 0.0
        %1365 = vmatpush1.xpose.msra.mxu0 0.0
        %1366 = vmatprep.subr.mxu0 0.0
        %1367 = vmatpush1.xpose.msra.mxu0 0.0
        %1368 = vmatprep.subr.mxu0 0.0
        %1369 = vmatpush1.xpose.msra.mxu0 0.0
        %1370 = vmatprep.subr.mxu0 0.0
        %1371 = vmatpush1.xpose.msra.mxu0 0.0
        %1372 = vmatprep.subr.mxu0 0.0
        %1373 = vmatpush1.xpose.msra.mxu0 0.0
        %1374 = vmatprep.subr.mxu0 0.0
        %1375 = vmatpush1.xpose.msra.mxu0 0.0
        %1376 = vmatprep.subr.mxu0 0.0
        %1377 = vmatpush1.xpose.msra.mxu0 0.0
        %1378 = vmatprep.mubr.f32.mxu0 0.0
        %1379 = vmatmul.mubr.f32.gmra.mrb[0].mxu0 %v1310
        %v1380 = vpop.f32.mrb[0].mxu0
        %v1381 = vadd.f32 0.0, %v1380
        %v1382 = vpop.f32.mrb[0].mxu0
        %1383 = vdwg.mxu0
        %v1384 = vsel %vm565, %v1381, -inf
        %1385 = vmax.xlane.f32.xlu0 %v1384
        %v1386 = vpop.xlane.xlu0 %1385
        %v1387 = vsub.f32 %v1381, %v1386
        %v1388 = vmul.f32 %v1387, 1.442695
        %v1389 = vpow.pop %v1388
        %v1390 = vsel %vm565, %v1389, 0.0
        %1391 = vadd.xlane.f32.xlu0 %v1390
        %v1392 = vpop.xlane.xlu0 %1391
        %v1393 = vrcp.pop %v1392
        %v1394 = vmul.f32 %v1389, %v1393
        %1396 = vrot.lane.b32.xlu0 %v487, 96
        %v1397 = vpop.permute.xlu0 %1396
        %v1400 = vsel %vm565, %v1394, 0
        %1402 = vmatprep.subr.mxu0 0.0
        %1403 = vmatpush1.msra.mxu0 %v1397
        %1404 = vmatprep.subr.mxu0 0.0
        %1405 = vmatpush1.msra.mxu0 0.0
        %1406 = vmatprep.subr.mxu0 0.0
        %1407 = vmatpush1.msra.mxu0 0.0
        %1408 = vmatprep.subr.mxu0 0.0
        %1409 = vmatpush1.msra.mxu0 0.0
        %1410 = vmatprep.subr.mxu0 0.0
        %1411 = vmatpush1.msra.mxu0 0.0
        %1412 = vmatprep.subr.mxu0 0.0
        %1413 = vmatpush1.msra.mxu0 0.0
        %1414 = vmatprep.subr.mxu0 0.0
        %1415 = vmatpush1.msra.mxu0 0.0
        %1416 = vmatprep.subr.mxu0 0.0
        %1417 = vmatpush1.msra.mxu0 0.0
        %1418 = vmatprep.subr.mxu0 0.0
        %1419 = vmatpush1.msra.mxu0 0.0
        %1420 = vmatprep.subr.mxu0 0.0
        %1421 = vmatpush1.msra.mxu0 0.0
        %1422 = vmatprep.subr.mxu0 0.0
        %1423 = vmatpush1.msra.mxu0 0.0
        %1424 = vmatprep.subr.mxu0 0.0
        %1425 = vmatpush1.msra.mxu0 0.0
        %1426 = vmatprep.subr.mxu0 0.0
        %1427 = vmatpush1.msra.mxu0 0.0
        %1428 = vmatprep.subr.mxu0 0.0
        %1429 = vmatpush1.msra.mxu0 0.0
        %1430 = vmatprep.subr.mxu0 0.0
        %1431 = vmatpush1.msra.mxu0 0.0
        %1432 = vmatprep.subr.mxu0 0.0
        %1433 = vmatpush1.msra.mxu0 0.0
        %1434 = vmatprep.subr.mxu0 0.0
        %1435 = vmatpush1.msra.mxu0 0.0
        %1436 = vmatprep.subr.mxu0 0.0
        %1437 = vmatpush1.msra.mxu0 0.0
        %1438 = vmatprep.subr.mxu0 0.0
        %1439 = vmatpush1.msra.mxu0 0.0
        %1440 = vmatprep.subr.mxu0 0.0
        %1441 = vmatpush1.msra.mxu0 0.0
        %1442 = vmatprep.subr.mxu0 0.0
        %1443 = vmatpush1.msra.mxu0 0.0
        %1444 = vmatprep.subr.mxu0 0.0
        %1445 = vmatpush1.msra.mxu0 0.0
        %1446 = vmatprep.subr.mxu0 0.0
        %1447 = vmatpush1.msra.mxu0 0.0
        %1448 = vmatprep.subr.mxu0 0.0
        %1449 = vmatpush1.msra.mxu0 0.0
        %1450 = vmatprep.subr.mxu0 0.0
        %1451 = vmatpush1.msra.mxu0 0.0
        %1452 = vmatprep.subr.mxu0 0.0
        %1453 = vmatpush1.msra.mxu0 0.0
        %1454 = vmatprep.subr.mxu0 0.0
        %1455 = vmatpush1.msra.mxu0 0.0
        %1456 = vmatprep.subr.mxu0 0.0
        %1457 = vmatpush1.msra.mxu0 0.0
        %1458 = vmatprep.subr.mxu0 0.0
        %1459 = vmatpush1.msra.mxu0 0.0
        %1460 = vmatprep.subr.mxu0 0.0
        %1461 = vmatpush1.msra.mxu0 0.0
        %1462 = vmatprep.subr.mxu0 0.0
        %1463 = vmatpush1.msra.mxu0 0.0
        %1464 = vmatprep.subr.mxu0 0.0
        %1465 = vmatpush1.msra.mxu0 0.0
        %1466 = vmatprep.mubr.f32.mxu0 0.0
        %1467 = vmatmul.mubr.f32.gmra.mrb[0].mxu0 %v1400
        %v1468 = vpop.f32.mrb[0].mxu0
        %v1469 = vadd.f32 0.0, %v1468
        %v1470 = vpop.f32.mrb[0].mxu0
        %1471 = vdwg.mxu0
        %1472 = vrot.lane.b32.xlu0 %v329, 64
        %v1473 = vpop.permute.xlu0 %1472
        %1474 = vrot.lane.b32.xlu0 %v408, 64
        %v1475 = vpop.permute.xlu0 %1474
        %v1476 = vsel %vm256, %v1473, 0
        %v1478 = vsel %vm256, %v1475, 0
        %1480 = vmatprep.subr.mxu0 0.0
        %1481 = vmatpush1.xpose.msra.mxu0 %v1478
        %1482 = vmatprep.subr.mxu0 0.0
        %1483 = vmatpush1.xpose.msra.mxu0 0.0
        %1484 = vmatprep.subr.mxu0 0.0
        %1485 = vmatpush1.xpose.msra.mxu0 0.0
        %1486 = vmatprep.subr.mxu0 0.0
        %1487 = vmatpush1.xpose.msra.mxu0 0.0
        %1488 = vmatprep.subr.mxu0 0.0
        %1489 = vmatpush1.xpose.msra.mxu0 0.0
        %1490 = vmatprep.subr.mxu0 0.0
        %1491 = vmatpush1.xpose.msra.mxu0 0.0
        %1492 = vmatprep.subr.mxu0 0.0
        %1493 = vmatpush1.xpose.msra.mxu0 0.0
        %1494 = vmatprep.subr.mxu0 0.0
        %1495 = vmatpush1.xpose.msra.mxu0 0.0
        %1496 = vmatprep.subr.mxu0 0.0
        %1497 = vmatpush1.xpose.msra.mxu0 0.0
        %1498 = vmatprep.subr.mxu0 0.0
        %1499 = vmatpush1.xpose.msra.mxu0 0.0
        %1500 = vmatprep.subr.mxu0 0.0
        %1501 = vmatpush1.xpose.msra.mxu0 0.0
        %1502 = vmatprep.subr.mxu0 0.0
        %1503 = vmatpush1.xpose.msra.mxu0 0.0
        %1504 = vmatprep.subr.mxu0 0.0
        %1505 = vmatpush1.xpose.msra.mxu0 0.0
        %1506 = vmatprep.subr.mxu0 0.0
        %1507 = vmatpush1.xpose.msra.mxu0 0.0
        %1508 = vmatprep.subr.mxu0 0.0
        %1509 = vmatpush1.xpose.msra.mxu0 0.0
        %1510 = vmatprep.subr.mxu0 0.0
        %1511 = vmatpush1.xpose.msra.mxu0 0.0
        %1512 = vmatprep.subr.mxu0 0.0
        %1513 = vmatpush1.xpose.msra.mxu0 0.0
        %1514 = vmatprep.subr.mxu0 0.0
        %1515 = vmatpush1.xpose.msra.mxu0 0.0
        %1516 = vmatprep.subr.mxu0 0.0
        %1517 = vmatpush1.xpose.msra.mxu0 0.0
        %1518 = vmatprep.subr.mxu0 0.0
        %1519 = vmatpush1.xpose.msra.mxu0 0.0
        %1520 = vmatprep.subr.mxu0 0.0
        %1521 = vmatpush1.xpose.msra.mxu0 0.0
        %1522 = vmatprep.subr.mxu0 0.0
        %1523 = vmatpush1.xpose.msra.mxu0 0.0
        %1524 = vmatprep.subr.mxu0 0.0
        %1525 = vmatpush1.xpose.msra.mxu0 0.0
        %1526 = vmatprep.subr.mxu0 0.0
        %1527 = vmatpush1.xpose.msra.mxu0 0.0
        %1528 = vmatprep.subr.mxu0 0.0
        %1529 = vmatpush1.xpose.msra.mxu0 0.0
        %1530 = vmatprep.subr.mxu0 0.0
        %1531 = vmatpush1.xpose.msra.mxu0 0.0
        %1532 = vmatprep.subr.mxu0 0.0
        %1533 = vmatpush1.xpose.msra.mxu0 0.0
        %1534 = vmatprep.subr.mxu0 0.0
        %1535 = vmatpush1.xpose.msra.mxu0 0.0
        %1536 = vmatprep.subr.mxu0 0.0
        %1537 = vmatpush1.xpose.msra.mxu0 0.0
        %1538 = vmatprep.subr.mxu0 0.0
        %1539 = vmatpush1.xpose.msra.mxu0 0.0
        %1540 = vmatprep.subr.mxu0 0.0
        %1541 = vmatpush1.xpose.msra.mxu0 0.0
        %1542 = vmatprep.subr.mxu0 0.0
        %1543 = vmatpush1.xpose.msra.mxu0 0.0
        %1544 = vmatprep.mubr.f32.mxu0 0.0
        %1545 = vmatmul.mubr.f32.gmra.mrb[0].mxu0 %v1476
        %v1546 = vpop.f32.mrb[0].mxu0
        %v1547 = vadd.f32 0.0, %v1546
        %v1548 = vpop.f32.mrb[0].mxu0
        %1549 = vdwg.mxu0
        %v1550 = vsel %vm565, %v1547, -inf
        %1551 = vmax.xlane.f32.xlu0 %v1550
        %v1552 = vpop.xlane.xlu0 %1551
        %v1553 = vsub.f32 %v1547, %v1552
        %v1554 = vmul.f32 %v1553, 1.442695
        %v1555 = vpow.pop %v1554
        %v1556 = vsel %vm565, %v1555, 0.0
        %1557 = vadd.xlane.f32.xlu0 %v1556
        %v1558 = vpop.xlane.xlu0 %1557
        %v1559 = vrcp.pop %v1558
        %v1560 = vmul.f32 %v1555, %v1559
        %1561 = vrot.lane.b32.xlu0 %v487, 64
        %v1562 = vpop.permute.xlu0 %1561
        %v1565 = vsel %vm565, %v1560, 0
        %1567 = vmatprep.subr.mxu0 0.0
        %1568 = vmatpush1.msra.mxu0 %v1562
        %1569 = vmatprep.subr.mxu0 0.0
        %1570 = vmatpush1.msra.mxu0 0.0
        %1571 = vmatprep.subr.mxu0 0.0
        %1572 = vmatpush1.msra.mxu0 0.0
        %1573 = vmatprep.subr.mxu0 0.0
        %1574 = vmatpush1.msra.mxu0 0.0
        %1575 = vmatprep.subr.mxu0 0.0
        %1576 = vmatpush1.msra.mxu0 0.0
        %1577 = vmatprep.subr.mxu0 0.0
        %1578 = vmatpush1.msra.mxu0 0.0
        %1579 = vmatprep.subr.mxu0 0.0
        %1580 = vmatpush1.msra.mxu0 0.0
        %1581 = vmatprep.subr.mxu0 0.0
        %1582 = vmatpush1.msra.mxu0 0.0
        %1583 = vmatprep.subr.mxu0 0.0
        %1584 = vmatpush1.msra.mxu0 0.0
        %1585 = vmatprep.subr.mxu0 0.0
        %1586 = vmatpush1.msra.mxu0 0.0
        %1587 = vmatprep.subr.mxu0 0.0
        %1588 = vmatpush1.msra.mxu0 0.0
        %1589 = vmatprep.subr.mxu0 0.0
        %1590 = vmatpush1.msra.mxu0 0.0
        %1591 = vmatprep.subr.mxu0 0.0
        %1592 = vmatpush1.msra.mxu0 0.0
        %1593 = vmatprep.subr.mxu0 0.0
        %1594 = vmatpush1.msra.mxu0 0.0
        %1595 = vmatprep.subr.mxu0 0.0
        %1596 = vmatpush1.msra.mxu0 0.0
        %1597 = vmatprep.subr.mxu0 0.0
        %1598 = vmatpush1.msra.mxu0 0.0
        %1599 = vmatprep.subr.mxu0 0.0
        %1600 = vmatpush1.msra.mxu0 0.0
        %1601 = vmatprep.subr.mxu0 0.0
        %1602 = vmatpush1.msra.mxu0 0.0
        %1603 = vmatprep.subr.mxu0 0.0
        %1604 = vmatpush1.msra.mxu0 0.0
        %1605 = vmatprep.subr.mxu0 0.0
        %1606 = vmatpush1.msra.mxu0 0.0
        %1607 = vmatprep.subr.mxu0 0.0
        %1608 = vmatpush1.msra.mxu0 0.0
        %1609 = vmatprep.subr.mxu0 0.0
        %1610 = vmatpush1.msra.mxu0 0.0
        %1611 = vmatprep.subr.mxu0 0.0
        %1612 = vmatpush1.msra.mxu0 0.0
        %1613 = vmatprep.subr.mxu0 0.0
        %1614 = vmatpush1.msra.mxu0 0.0
        %1615 = vmatprep.subr.mxu0 0.0
        %1616 = vmatpush1.msra.mxu0 0.0
        %1617 = vmatprep.subr.mxu0 0.0
        %1618 = vmatpush1.msra.mxu0 0.0
        %1619 = vmatprep.subr.mxu0 0.0
        %1620 = vmatpush1.msra.mxu0 0.0
        %1621 = vmatprep.subr.mxu0 0.0
        %1622 = vmatpush1.msra.mxu0 0.0
        %1623 = vmatprep.subr.mxu0 0.0
        %1624 = vmatpush1.msra.mxu0 0.0
        %1625 = vmatprep.subr.mxu0 0.0
        %1626 = vmatpush1.msra.mxu0 0.0
        %1627 = vmatprep.subr.mxu0 0.0
        %1628 = vmatpush1.msra.mxu0 0.0
        %1629 = vmatprep.subr.mxu0 0.0
        %1630 = vmatpush1.msra.mxu0 0.0
        %1631 = vmatprep.mubr.f32.mxu0 0.0
        %1632 = vmatmul.mubr.f32.gmra.mrb[0].mxu0 %v1565
        %v1633 = vpop.f32.mrb[0].mxu0
        %v1634 = vadd.f32 0.0, %v1633
        %v1635 = vpop.f32.mrb[0].mxu0
        %1636 = vdwg.mxu0
        %1637 = vrot.lane.b32.xlu0 %v329, 32
        %v1638 = vpop.permute.xlu0 %1637
        %1639 = vrot.lane.b32.xlu0 %v408, 32
        %v1640 = vpop.permute.xlu0 %1639
        %v1641 = vsel %vm256, %v1638, 0
        %v1643 = vsel %vm256, %v1640, 0
        %1645 = vmatprep.subr.mxu0 0.0
        %1646 = vmatpush1.xpose.msra.mxu0 %v1643
        %1647 = vmatprep.subr.mxu0 0.0
        %1648 = vmatpush1.xpose.msra.mxu0 0.0
        %1649 = vmatprep.subr.mxu0 0.0
        %1650 = vmatpush1.xpose.msra.mxu0 0.0
        %1651 = vmatprep.subr.mxu0 0.0
        %1652 = vmatpush1.xpose.msra.mxu0 0.0
        %1653 = vmatprep.subr.mxu0 0.0
        %1654 = vmatpush1.xpose.msra.mxu0 0.0
        %1655 = vmatprep.subr.mxu0 0.0
        %1656 = vmatpush1.xpose.msra.mxu0 0.0
        %1657 = vmatprep.subr.mxu0 0.0
        %1658 = vmatpush1.xpose.msra.mxu0 0.0
        %1659 = vmatprep.subr.mxu0 0.0
        %1660 = vmatpush1.xpose.msra.mxu0 0.0
        %1661 = vmatprep.subr.mxu0 0.0
        %1662 = vmatpush1.xpose.msra.mxu0 0.0
        %1663 = vmatprep.subr.mxu0 0.0
        %1664 = vmatpush1.xpose.msra.mxu0 0.0
        %1665 = vmatprep.subr.mxu0 0.0
        %1666 = vmatpush1.xpose.msra.mxu0 0.0
        %1667 = vmatprep.subr.mxu0 0.0
        %1668 = vmatpush1.xpose.msra.mxu0 0.0
        %1669 = vmatprep.subr.mxu0 0.0
        %1670 = vmatpush1.xpose.msra.mxu0 0.0
        %1671 = vmatprep.subr.mxu0 0.0
        %1672 = vmatpush1.xpose.msra.mxu0 0.0
        %1673 = vmatprep.subr.mxu0 0.0
        %1674 = vmatpush1.xpose.msra.mxu0 0.0
        %1675 = vmatprep.subr.mxu0 0.0
        %1676 = vmatpush1.xpose.msra.mxu0 0.0
        %1677 = vmatprep.subr.mxu0 0.0
        %1678 = vmatpush1.xpose.msra.mxu0 0.0
        %1679 = vmatprep.subr.mxu0 0.0
        %1680 = vmatpush1.xpose.msra.mxu0 0.0
        %1681 = vmatprep.subr.mxu0 0.0
        %1682 = vmatpush1.xpose.msra.mxu0 0.0
        %1683 = vmatprep.subr.mxu0 0.0
        %1684 = vmatpush1.xpose.msra.mxu0 0.0
        %1685 = vmatprep.subr.mxu0 0.0
        %1686 = vmatpush1.xpose.msra.mxu0 0.0
        %1687 = vmatprep.subr.mxu0 0.0
        %1688 = vmatpush1.xpose.msra.mxu0 0.0
        %1689 = vmatprep.subr.mxu0 0.0
        %1690 = vmatpush1.xpose.msra.mxu0 0.0
        %1691 = vmatprep.subr.mxu0 0.0
        %1692 = vmatpush1.xpose.msra.mxu0 0.0
        %1693 = vmatprep.subr.mxu0 0.0
        %1694 = vmatpush1.xpose.msra.mxu0 0.0
        %1695 = vmatprep.subr.mxu0 0.0
        %1696 = vmatpush1.xpose.msra.mxu0 0.0
        %1697 = vmatprep.subr.mxu0 0.0
        %1698 = vmatpush1.xpose.msra.mxu0 0.0
        %1699 = vmatprep.subr.mxu0 0.0
        %1700 = vmatpush1.xpose.msra.mxu0 0.0
        %1701 = vmatprep.subr.mxu0 0.0
        %1702 = vmatpush1.xpose.msra.mxu0 0.0
        %1703 = vmatprep.subr.mxu0 0.0
        %1704 = vmatpush1.xpose.msra.mxu0 0.0
        %1705 = vmatprep.subr.mxu0 0.0
        %1706 = vmatpush1.xpose.msra.mxu0 0.0
        %1707 = vmatprep.subr.mxu0 0.0
        %1708 = vmatpush1.xpose.msra.mxu0 0.0
        %1709 = vmatprep.mubr.f32.mxu0 0.0
        %1710 = vmatmul.mubr.f32.gmra.mrb[0].mxu0 %v1641
        %v1711 = vpop.f32.mrb[0].mxu0
        %v1712 = vadd.f32 0.0, %v1711
        %v1713 = vpop.f32.mrb[0].mxu0
        %1714 = vdwg.mxu0
        %v1715 = vsel %vm565, %v1712, -inf
        %1716 = vmax.xlane.f32.xlu0 %v1715
        %v1717 = vpop.xlane.xlu0 %1716
        %v1718 = vsub.f32 %v1712, %v1717
        %v1719 = vmul.f32 %v1718, 1.442695
        %v1720 = vpow.pop %v1719
        %v1721 = vsel %vm565, %v1720, 0.0
        %1722 = vadd.xlane.f32.xlu0 %v1721
        %v1723 = vpop.xlane.xlu0 %1722
        %v1724 = vrcp.pop %v1723
        %v1725 = vmul.f32 %v1720, %v1724
        %1726 = vrot.lane.b32.xlu0 %v487, 32
        %v1727 = vpop.permute.xlu0 %1726
        %v1730 = vsel %vm565, %v1725, 0
        %1732 = vmatprep.subr.mxu0 0.0
        %1733 = vmatpush1.msra.mxu0 %v1727
        %1734 = vmatprep.subr.mxu0 0.0
        %1735 = vmatpush1.msra.mxu0 0.0
        %1736 = vmatprep.subr.mxu0 0.0
        %1737 = vmatpush1.msra.mxu0 0.0
        %1738 = vmatprep.subr.mxu0 0.0
        %1739 = vmatpush1.msra.mxu0 0.0
        %1740 = vmatprep.subr.mxu0 0.0
        %1741 = vmatpush1.msra.mxu0 0.0
        %1742 = vmatprep.subr.mxu0 0.0
        %1743 = vmatpush1.msra.mxu0 0.0
        %1744 = vmatprep.subr.mxu0 0.0
        %1745 = vmatpush1.msra.mxu0 0.0
        %1746 = vmatprep.subr.mxu0 0.0
        %1747 = vmatpush1.msra.mxu0 0.0
        %1748 = vmatprep.subr.mxu0 0.0
        %1749 = vmatpush1.msra.mxu0 0.0
        %1750 = vmatprep.subr.mxu0 0.0
        %1751 = vmatpush1.msra.mxu0 0.0
        %1752 = vmatprep.subr.mxu0 0.0
        %1753 = vmatpush1.msra.mxu0 0.0
        %1754 = vmatprep.subr.mxu0 0.0
        %1755 = vmatpush1.msra.mxu0 0.0
        %1756 = vmatprep.subr.mxu0 0.0
        %1757 = vmatpush1.msra.mxu0 0.0
        %1758 = vmatprep.subr.mxu0 0.0
        %1759 = vmatpush1.msra.mxu0 0.0
        %1760 = vmatprep.subr.mxu0 0.0
        %1761 = vmatpush1.msra.mxu0 0.0
        %1762 = vmatprep.subr.mxu0 0.0
        %1763 = vmatpush1.msra.mxu0 0.0
        %1764 = vmatprep.subr.mxu0 0.0
        %1765 = vmatpush1.msra.mxu0 0.0
        %1766 = vmatprep.subr.mxu0 0.0
        %1767 = vmatpush1.msra.mxu0 0.0
        %1768 = vmatprep.subr.mxu0 0.0
        %1769 = vmatpush1.msra.mxu0 0.0
        %1770 = vmatprep.subr.mxu0 0.0
        %1771 = vmatpush1.msra.mxu0 0.0
        %1772 = vmatprep.subr.mxu0 0.0
        %1773 = vmatpush1.msra.mxu0 0.0
        %1774 = vmatprep.subr.mxu0 0.0
        %1775 = vmatpush1.msra.mxu0 0.0
        %1776 = vmatprep.subr.mxu0 0.0
        %1777 = vmatpush1.msra.mxu0 0.0
        %1778 = vmatprep.subr.mxu0 0.0
        %1779 = vmatpush1.msra.mxu0 0.0
        %1780 = vmatprep.subr.mxu0 0.0
        %1781 = vmatpush1.msra.mxu0 0.0
        %1782 = vmatprep.subr.mxu0 0.0
        %1783 = vmatpush1.msra.mxu0 0.0
        %1784 = vmatprep.subr.mxu0 0.0
        %1785 = vmatpush1.msra.mxu0 0.0
        %1786 = vmatprep.subr.mxu0 0.0
        %1787 = vmatpush1.msra.mxu0 0.0
        %1788 = vmatprep.subr.mxu0 0.0
        %1789 = vmatpush1.msra.mxu0 0.0
        %1790 = vmatprep.subr.mxu0 0.0
        %1791 = vmatpush1.msra.mxu0 0.0
        %1792 = vmatprep.subr.mxu0 0.0
        %1793 = vmatpush1.msra.mxu0 0.0
        %1794 = vmatprep.subr.mxu0 0.0
        %1795 = vmatpush1.msra.mxu0 0.0
        %1796 = vmatprep.mubr.f32.mxu0 0.0
        %1797 = vmatmul.mubr.f32.gmra.mrb[0].mxu0 %v1730
        %v1798 = vpop.f32.mrb[0].mxu0
        %v1799 = vadd.f32 0.0, %v1798
        %v1800 = vpop.f32.mrb[0].mxu0
        %1801 = vdwg.mxu0
        %1803 = vrot.lane.b32.xlu0 %v813, 32
        %v1804 = vpop.permute.xlu0 %1803
        %1807 = vrot.lane.b32.xlu0 %v978, 64
        %v1808 = vpop.permute.xlu0 %1807
        %1811 = vrot.lane.b32.xlu0 %v1143, 96
        %v1812 = vpop.permute.xlu0 %1811
        %1815 = vrot.lane.b32.xlu0 %v1469, 32
        %v1816 = vpop.permute.xlu0 %1815
        %1819 = vrot.lane.b32.xlu0 %v1634, 64
        %v1820 = vpop.permute.xlu0 %1819
        %1823 = vrot.lane.b32.xlu0 %v1799, 96
        %v1824 = vpop.permute.xlu0 %1823
        %v1826 = vsel %vm256, %v647, %v1804
        %vm1827 = vcmask 523264
        %v1828 = vsel %vm1827, %v1826, %v1808
        %vm1829 = vcmask 785408
        %v1830 = vsel %vm1829, %v1828, %v1812
        %v1831 = vsel %vm256, %v1303, %v1816
        %v1832 = vsel %vm1827, %v1831, %v1820
        %v1833 = vsel %vm1829, %v1832, %v1824
        %v1834 = vld [vmem:[%s4] sm:$0xff]
        %v1835 = vld [vmem:[%s4 + $0x8] sm:$0xff]
        %v1836 = vld [vmem:[%s4 + $0x10] sm:$0xff]
        %v1837 = vld [vmem:[%s4 + $0x18] sm:$0xff]
        %v1838 = vld [vmem:[%s4 + $0x20] sm:$0xff]
        %v1839 = vld [vmem:[%s4 + $0x28] sm:$0xff]
        %v1840 = vld [vmem:[%s4 + $0x30] sm:$0xff]
        %v1841 = vld [vmem:[%s4 + $0x38] sm:$0xff]
        %v1842 = vld [vmem:[%s4 + $0x40] sm:$0xff]
        %v1843 = vld [vmem:[%s4 + $0x48] sm:$0xff]
        %v1844 = vld [vmem:[%s4 + $0x50] sm:$0xff]
        %v1845 = vld [vmem:[%s4 + $0x58] sm:$0xff]
        %v1846 = vld [vmem:[%s4 + $0x60] sm:$0xff]
        %v1847 = vld [vmem:[%s4 + $0x68] sm:$0xff]
        %v1848 = vld [vmem:[%s4 + $0x70] sm:$0xff]
        %v1849 = vld [vmem:[%s4 + $0x78] sm:$0xff]
        %v1850 = vld [vmem:[%s4 + $0x80] sm:$0xff]
        %v1851 = vld [vmem:[%s4 + $0x88] sm:$0xff]
        %v1852 = vld [vmem:[%s4 + $0x90] sm:$0xff]
        %v1853 = vld [vmem:[%s4 + $0x98] sm:$0xff]
        %v1854 = vld [vmem:[%s4 + $0xa0] sm:$0xff]
        %v1855 = vld [vmem:[%s4 + $0xa8] sm:$0xff]
        %v1856 = vld [vmem:[%s4 + $0xb0] sm:$0xff]
        %v1857 = vld [vmem:[%s4 + $0xb8] sm:$0xff]
        %v1858 = vld [vmem:[%s4 + $0xc0] sm:$0xff]
        %v1859 = vld [vmem:[%s4 + $0xc8] sm:$0xff]
        %v1860 = vld [vmem:[%s4 + $0xd0] sm:$0xff]
        %v1861 = vld [vmem:[%s4 + $0xd8] sm:$0xff]
        %v1862 = vld [vmem:[%s4 + $0xe0] sm:$0xff]
        %v1863 = vld [vmem:[%s4 + $0xe8] sm:$0xff]
        %v1864 = vld [vmem:[%s4 + $0xf0] sm:$0xff]
        %v1865 = vld [vmem:[%s4 + $0xf8] sm:$0xff]
        %v1866 = vld [vmem:[%s5] sm:$0x1]
        %v1868 = vlaneseq
        %v1869 = vshrl.u32 %v1868, 7
        %v1870 = vsub.s32 0, %v1869
        %v1871 = vrot.slane %v1866, %v1870
        %1873 = vmatprep.subr.mxu0 0.0
        %1874 = vmatpush1.msra.mxu0 %v1834
        %1875 = vmatprep.subr.mxu0 0.0
        %1876 = vmatpush1.msra.mxu0 %v1835
        %1877 = vmatprep.subr.mxu0 0.0
        %1878 = vmatpush1.msra.mxu0 %v1836
        %1879 = vmatprep.subr.mxu0 0.0
        %1880 = vmatpush1.msra.mxu0 %v1837
        %1881 = vmatprep.subr.mxu0 0.0
        %1882 = vmatpush1.msra.mxu0 %v1838
        %1883 = vmatprep.subr.mxu0 0.0
        %1884 = vmatpush1.msra.mxu0 %v1839
        %1885 = vmatprep.subr.mxu0 0.0
        %1886 = vmatpush1.msra.mxu0 %v1840
        %1887 = vmatprep.subr.mxu0 0.0
        %1888 = vmatpush1.msra.mxu0 %v1841
        %1889 = vmatprep.subr.mxu0 0.0
        %1890 = vmatpush1.msra.mxu0 %v1842
        %1891 = vmatprep.subr.mxu0 0.0
        %1892 = vmatpush1.msra.mxu0 %v1843
        %1893 = vmatprep.subr.mxu0 0.0
        %1894 = vmatpush1.msra.mxu0 %v1844
        %1895 = vmatprep.subr.mxu0 0.0
        %1896 = vmatpush1.msra.mxu0 %v1845
        %1897 = vmatprep.subr.mxu0 0.0
        %1898 = vmatpush1.msra.mxu0 %v1846
        %1899 = vmatprep.subr.mxu0 0.0
        %1900 = vmatpush1.msra.mxu0 %v1847
        %1901 = vmatprep.subr.mxu0 0.0
        %1902 = vmatpush1.msra.mxu0 %v1848
        %1903 = vmatprep.subr.mxu0 0.0
        %1904 = vmatpush1.msra.mxu0 %v1849
        %1905 = vmatprep.subr.mxu0 0.0
        %1906 = vmatpush1.msra.mxu0 %v1850
        %1907 = vmatprep.subr.mxu0 0.0
        %1908 = vmatpush1.msra.mxu0 %v1851
        %1909 = vmatprep.subr.mxu0 0.0
        %1910 = vmatpush1.msra.mxu0 %v1852
        %1911 = vmatprep.subr.mxu0 0.0
        %1912 = vmatpush1.msra.mxu0 %v1853
        %1913 = vmatprep.subr.mxu0 0.0
        %1914 = vmatpush1.msra.mxu0 %v1854
        %1915 = vmatprep.subr.mxu0 0.0
        %1916 = vmatpush1.msra.mxu0 %v1855
        %1917 = vmatprep.subr.mxu0 0.0
        %1918 = vmatpush1.msra.mxu0 %v1856
        %1919 = vmatprep.subr.mxu0 0.0
        %1920 = vmatpush1.msra.mxu0 %v1857
        %1921 = vmatprep.subr.mxu0 0.0
        %1922 = vmatpush1.msra.mxu0 %v1858
        %1923 = vmatprep.subr.mxu0 0.0
        %1924 = vmatpush1.msra.mxu0 %v1859
        %1925 = vmatprep.subr.mxu0 0.0
        %1926 = vmatpush1.msra.mxu0 %v1860
        %1927 = vmatprep.subr.mxu0 0.0
        %1928 = vmatpush1.msra.mxu0 %v1861
        %1929 = vmatprep.subr.mxu0 0.0
        %1930 = vmatpush1.msra.mxu0 %v1862
        %1931 = vmatprep.subr.mxu0 0.0
        %1932 = vmatpush1.msra.mxu0 %v1863
        %1933 = vmatprep.subr.mxu0 0.0
        %1934 = vmatpush1.msra.mxu0 %v1864
        %1935 = vmatprep.subr.mxu0 0.0
        %1936 = vmatpush1.msra.mxu0 %v1865
        %1937 = vmatprep.mubr.f32.mxu0 %v1833
        %1938 = vmatmul.mubr.f32.gmra.mrb[0].mxu0 %v1830
        %v1939 = vpop.f32.mrb[0].mxu0
        %v1940 = vadd.f32 %v1871, %v1939
        %v1941 = vpop.f32.mrb[0].mxu0
        %1942 = vdwg.mxu0
        %1943 = vst.msk [vmem:[%s242] sm:$0xff] %vm256, %v1940
        %s1944 = sand.u32 %s159, 1
        %s1945 = scalar_lea.sflag [#allocation3], %s1944
        %s1946 = sand.u32 %s159, 1
        %s1947 = smul.addr %s1946, 8
        %s1948 = scalar_lea.vmem [#allocation2], %s1947
        // Predicated region
        $region45: #{attention_layer.1} parent=43 // pred_check
          %p1949 = pneg %p169
        $region46: #{attention_layer.1} parent=43 // pred_check_branch
          %1951 = sbr.rel (%p1949) target = $region48
        $region47: #{attention_layer.1} parent=43 // pred_region
          %s1953 = ssub.s32 128, 128
          %1954 = vsyncadd %s1945, %s1953
          %s1955 = smul.addr %s20, 128
          %s1956 = scalar_lea.hbm %s6, %s1955
          %s1958 = sshll.u32 %s1948, 4
          %s1959 = int_to_ptr.vmem [resolvable:$true] %s1958
          %1961 = dma.vmem_to_hbm [thread:$0]  %s1959, 128, %s1956, %s1945
        $region48: #{attention_layer.1} parent=43 // pred_fallthru
          _
      $region44: #{attention_layer.1} parent=5 // pred_fallthru
        _
      %p1962 = scmp.le.s32.totalorder 2, %s15
      // Predicated region
      $region49: #{attention_layer.1} parent=5 // pred_check
        %p1963 = pneg %p1962
      $region50: #{attention_layer.1} parent=5 // pred_check_branch
        %1965 = sbr.rel (%p1963) target = $region52
      $region51: #{attention_layer.1} parent=5 // pred_region
        %s1966 = ssub.s32 %s15, 2
        // Predicated region
        $region53: #{attention_layer.1} parent=51 // pred_check
          %p1967 = pneg %p175
        $region54: #{attention_layer.1} parent=51 // pred_check_branch
          %1969 = sbr.rel (%p1967) target = $region56
        $region55: #{attention_layer.1} parent=51 // pred_region
          %s1970 = sand.u32 %s160, 1
          %s1971 = scalar_lea.sflag [#allocation3], %s1970
          %s1972 = sand.u32 %s160, 1
          %s1973 = smul.addr %s1972, 8
          %s1974 = scalar_lea.vmem [#allocation2], %s1973
          %1975 = dma.done %s1971, 128
        $region56: #{attention_layer.1} parent=51 // pred_fallthru
          _
      $region52: #{attention_layer.1} parent=5 // pred_fallthru
        _
    $region6: #{attention_layer.1} parent=1 // loop_footer
      %s19 = sadd.s32 1, %s15
    $region7: #{attention_layer.1} parent=1 // loop_footer_branch
      %14 = sbr.rel target = $region3
    $region8: #{attention_layer.1} parent=1 // loop_exit
      _
    %1976 = vsyncpa [#allocation3], 1
    %s1977 = scalar_lea.sflag [#allocation3], 1
    %1978 = vsyncpa %s1977, 1

</llo_original>
